<compile_context>
chip_gen: v7x
topology: tpu7x:2x2x1
jax: 0.10.0
libtpu: 0.0.40
codegen_flags: <defaults>
</compile_context>

<pallas_src>
import functools

import jax
import jax.numpy as jnp
from jax.experimental import pallas as pl
from jax.experimental.pallas import tpu as pltpu

_NEG = -1e30  # bias for padded logit lanes -> exp() underflows to exactly 0


def _round_up(n, m):
    return ((n + m - 1) // m) * m


def _pick_chunk(t, max_chunk=64):
    """Largest divisor of t that is <= max_chunk (t itself when t is small)."""
    if t <= max_chunk:
        return t
    for c in range(max_chunk, 0, -1):
        if t % c == 0:
            return c
    return 1


def _rnn_chunk_kernel(x_ref, wx_ref, wh_ref, b_ref, h0_ref,
                      logp_ref, hfin_ref, h_scr, xproj_scr,
                      *, t_blk, batch, h_pad):
    """Processes T_BLK timesteps per grid step.

    x_ref    : (T_BLK*B, I)      chunk of inputs, time-major rows (streamed)
    wx_ref   : (I,  Hp+Op)       fused weight, input rows   (VMEM-resident)
    wh_ref   : (Hp, Hp+Op)       fused weight, hidden rows  (VMEM-resident)
    b_ref    : (1,  Hp+Op)       fused bias (padded logit cols = -1e30)
    h0_ref   : (B,  Hp)          initial hidden             (VMEM-resident)
    logp_ref : (T_BLK*B, Op)     per-step log-softmax outputs (lane-dense)
    hfin_ref : (B,  Hp)          final hidden (constant block; last write wins)
    h_scr    : (B,  Hp)  VMEM    hidden carry across chunks
    xproj_scr: (T_BLK*B, Hp+Op)  chunk-wide x-projection (+bias)
    """
    c = pl.program_id(0)

    @pl.when(c == 0)
    def _():
        h_scr[...] = h0_ref[...]

    # Chunk prologue: project every timestep of the chunk through Wx in one
    # wide matmul and fold in the bias.  Lives OFF the serial h-chain.
    xproj_scr[...] = (
        jnp.dot(x_ref[...], wx_ref[...], preferred_element_type=jnp.float32)
        + b_ref[...]
    )

    def step(t, h):
        r0 = pl.multiple_of(t * batch, batch)
        fused = xproj_scr[pl.ds(r0, batch), :] + jnp.dot(
            h, wh_ref[...], preferred_element_type=jnp.float32)  # (B, Hp+Op)

        new_h = fused[:, :h_pad]       # (B, Hp)  padded columns stay exactly 0
        logits = fused[:, h_pad:]      # (B, Op)  padded columns ~ -1e30

        # Numerically-stable LogSoftmax along features; padded lanes add
        # exp(-1e30 - m) == 0 to the normalizer, so only real O columns count.
        m = jnp.max(logits, axis=1, keepdims=True)
        sh = logits - m
        logp = sh - jnp.log(jnp.sum(jnp.exp(sh), axis=1, keepdims=True))

        logp_ref[pl.ds(r0, batch), :] = logp
        return new_h

    h_final = jax.lax.fori_loop(0, t_blk, step, h_scr[...], unroll=True)
    h_scr[...] = h_final
    hfin_ref[...] = h_final


@functools.partial(jax.jit, static_argnames=("max_chunk",))
def rnn_forward_seq(xs, hidden0, params, *, max_chunk=64):
    """Run the RNN cell over a whole sequence inside ONE pallas_call.

    xs      : (T, B, I)
    hidden0 : (B, H)
    returns : (outputs (T, B, O) log-probs, final_hidden (B, H))
    Per-step semantics are identical to RNN.forward of the PyTorch module.
    """
    w_i2h, b_i2h, w_i2o, b_i2o = params
    T, B, I = xs.shape
    H = w_i2h.shape[0]          # PyTorch Linear weight layout is (out, in)
    O = w_i2o.shape[0]
    Hp = _round_up(H, 128)
    Op = _round_up(O, 128)
    HOp = Hp + Op
    t_blk = _pick_chunk(T, max_chunk)
    n_chunks = T // t_blk

    # ---- one-time parameter prep (outside the time loop) ----
    # Fuse i2h/i2o into one pre-transposed (I+H, H+O) matrix, split into
    # x-rows / h-rows, and pad every lane dimension to a multiple of 128.
    w_fused = jnp.concatenate([w_i2h, w_i2o], axis=0).T          # (I+H, H+O)
    wx_s, wh_s = w_fused[:I], w_fused[I:]                        # (I,*), (H,*)

    wx = jnp.zeros((I, HOp), jnp.float32)
    wx = wx.at[:, :H].set(wx_s[:, :H]).at[:, Hp:Hp + O].set(wx_s[:, H:])
    wh = jnp.zeros((Hp, HOp), jnp.float32)
    wh = wh.at[:H, :H].set(wh_s[:, :H]).at[:H, Hp:Hp + O].set(wh_s[:, H:])
    b = jnp.full((1, HOp), _NEG, jnp.float32)
    b = b.at[0, :Hp].set(0.0).at[0, :H].set(b_i2h).at[0, Hp:Hp + O].set(b_i2o)

    h0p = jnp.zeros((B, Hp), jnp.float32).at[:, :H].set(hidden0)
    xs2d = xs.reshape(T * B, I)                                   # time-major rows

    kernel = functools.partial(_rnn_chunk_kernel,
                               t_blk=t_blk, batch=B, h_pad=Hp)

    cost = pl.CostEstimate(
        flops=2 * T * B * (I + Hp) * HOp + 5 * T * B * Op,
        transcendentals=T * B * (Op + 1),
        bytes_accessed=4 * (xs2d.size + wx.size + wh.size + b.size
                            + h0p.size + T * B * Op + B * Hp),
    )

    logp2d, hfin = pl.pallas_call(
        kernel,
        out_shape=(jax.ShapeDtypeStruct((T * B, Op), jnp.float32),
                   jax.ShapeDtypeStruct((B, Hp), jnp.float32)),
        grid=(n_chunks,),
        in_specs=[
            pl.BlockSpec((t_blk * B, I), lambda c: (c, 0)),   # x chunk (streamed)
            pl.BlockSpec((I, HOp), lambda c: (0, 0)),         # Wx   (resident)
            pl.BlockSpec((Hp, HOp), lambda c: (0, 0)),        # Wh   (resident)
            pl.BlockSpec((1, HOp), lambda c: (0, 0)),         # bias (resident)
            pl.BlockSpec((B, Hp), lambda c: (0, 0)),          # h0   (resident)
        ],
        out_specs=(
            pl.BlockSpec((t_blk * B, Op), lambda c: (c, 0)),  # log-prob chunk
            pl.BlockSpec((B, Hp), lambda c: (0, 0)),          # final hidden
        ),
        scratch_shapes=[
            pltpu.VMEM((B, Hp), jnp.float32),                 # hidden carry
            pltpu.VMEM((t_blk * B, HOp), jnp.float32),        # chunk x-projection
        ],
        compiler_params=pltpu.CompilerParams(
            dimension_semantics=("arbitrary",),   # hidden carries across chunks
            vmem_limit_bytes=32 * 1024 * 1024,
        ),
        cost_estimate=cost,
    )(xs2d, wx, wh, b, h0p)

    outputs = logp2d.reshape(T, B, Op)[:, :, :O]   # strip lane padding
    final_hidden = hfin[:, :H]
    return outputs, final_hidden


def rnn_forward(x, hidden, params):
    """Single-step API matching RNN.forward(input, hidden) -> (output, hidden)."""
    outputs, new_hidden = rnn_forward_seq(x[None], hidden, params)
    return outputs[0], new_hidden


def init_params(key, input_size, hidden_size, output_size):
    """Deterministic init mimicking nn.Linear (uniform +-1/sqrt(fan_in))."""
    k1, k2, k3, k4 = jax.random.split(key, 4)
    fan_in = input_size + hidden_size
    bound = 1.0 / (fan_in ** 0.5)
    w_i2h = jax.random.uniform(k1, (hidden_size, fan_in), jnp.float32, -bound, bound)
    b_i2h = jax.random.uniform(k2, (hidden_size,), jnp.float32, -bound, bound)
    w_i2o = jax.random.uniform(k3, (output_size, fan_in), jnp.float32, -bound, bound)
    b_i2o = jax.random.uniform(k4, (output_size,), jnp.float32, -bound, bound)
    return w_i2h, b_i2h, w_i2o, b_i2o


if __name__ == "__main__":
    key = jax.random.PRNGKey(0)
    kx, kh, kp = jax.random.split(key, 3)

    seq_len = 8
    batch = 8          # multiple of the f32 sublane tile (8)
    input_size = 16
    hidden_size = 32
    output_size = 8

    xs = jax.random.normal(kx, (seq_len, batch, input_size), jnp.float32)
    hidden0 = jnp.zeros((batch, hidden_size), jnp.float32)   # initHidden, broadcast to batch
    params = init_params(kp, input_size, hidden_size, output_size)
    w_i2h, b_i2h, w_i2o, b_i2o = params

    # --- sequence run (time loop lives inside the kernel) ---
    outs, h_final = rnn_forward_seq(xs, hidden0, params)
    jax.block_until_ready((outs, h_final))

    # pure-JAX reference with identical per-step semantics to the PyTorch module
    def ref_step(h, x):
        comb = jnp.concatenate([x, h], axis=1)
        new_h = comb @ w_i2h.T + b_i2h
        logits = comb @ w_i2o.T + b_i2o
        return new_h, jax.nn.log_softmax(logits, axis=1)

    ref_h_final, ref_outs = jax.lax.scan(ref_step, hidden0, xs)
    assert jnp.allclose(outs, ref_outs, atol=1e-4), "sequence output mismatch"
    assert jnp.allclose(h_final, ref_h_final, atol=1e-4), "final hidden mismatch"

    # --- single-step API (exact RNN.forward signature) ---
    x0 = xs[0]
    out1, h1 = rnn_forward(x0, hidden0, params)
    jax.block_until_ready((out1, h1))
    ref_h1, ref_out1 = ref_step(hidden0, x0)
    assert jnp.allclose(out1, ref_out1, atol=1e-4), "single-step output mismatch"
    assert jnp.allclose(h1, ref_h1, atol=1e-4), "single-step hidden mismatch"

    print("KERNEL_OK")
</pallas_src>

<mosaic_0001>
module attributes {stable_mosaic.version = 11 : i64} {
  func.func @_rnn_chunk_kernel(%arg0: i32, %arg1: memref<64x16xf32, #tpu.memory_space<vmem>>, %arg2: memref<16x256xf32, #tpu.memory_space<vmem>>, %arg3: memref<128x256xf32, #tpu.memory_space<vmem>>, %arg4: memref<1x256xf32, #tpu.memory_space<vmem>>, %arg5: memref<8x128xf32, #tpu.memory_space<vmem>>, %arg6: memref<64x128xf32, #tpu.memory_space<vmem>>, %arg7: memref<8x128xf32, #tpu.memory_space<vmem>>, %arg8: memref<8x128xf32, #tpu.memory_space<vmem>>, %arg9: memref<64x256xf32, #tpu.memory_space<vmem>>) attributes {dimension_semantics = [#tpu.dimension_semantics<arbitrary>], iteration_bounds = array<i64: 1>, scalar_prefetch = 0 : i64, scratch_operands = 2 : i64, tpu.core_type = #tpu.core_type<tc>, window_params = [{transform_indices = @transform_0, window_bounds = array<i64: 64, 16>}, {pipeline_mode = #tpu.pipeline_mode<synchronous>, transform_indices = @transform_1, window_bounds = array<i64: 16, 256>}, {pipeline_mode = #tpu.pipeline_mode<synchronous>, transform_indices = @transform_2, window_bounds = array<i64: 128, 256>}, {pipeline_mode = #tpu.pipeline_mode<synchronous>, transform_indices = @transform_3, window_bounds = array<i64: 1, 256>}, {pipeline_mode = #tpu.pipeline_mode<synchronous>, transform_indices = @transform_4, window_bounds = array<i64: 8, 128>}, {transform_indices = @transform_5, window_bounds = array<i64: 64, 128>}, {pipeline_mode = #tpu.pipeline_mode<synchronous>, transform_indices = @transform_6, window_bounds = array<i64: 8, 128>}]} {
    %c0_i32 = arith.constant 0 : i32
    %0 = arith.cmpi eq, %arg0, %c0_i32 : i32
    %1 = arith.extui %0 : i1 to i32
    %c0_i32_0 = arith.constant 0 : i32
    %2 = arith.cmpi ne, %1, %c0_i32_0 : i32
    scf.if %2 {
      %c0_79 = arith.constant 0 : index
      %c0_80 = arith.constant 0 : index
      %181 = vector.load %arg5[%c0_79, %c0_80] : memref<8x128xf32, #tpu.memory_space<vmem>>, vector<8x128xf32>
      %c0_81 = arith.constant 0 : index
      %c0_82 = arith.constant 0 : index
      %182 = vector.load %arg8[%c0_81, %c0_82] : memref<8x128xf32, #tpu.memory_space<vmem>>, vector<8x128xf32>
      tpu.vector_store %arg8[%c0_81, %c0_82], %181 {strides = array<i32>} : memref<8x128xf32, #tpu.memory_space<vmem>>, vector<8x128xf32>,
    } else {
    }
    %c0 = arith.constant 0 : index
    %c0_1 = arith.constant 0 : index
    %3 = vector.load %arg1[%c0, %c0_1] : memref<64x16xf32, #tpu.memory_space<vmem>>, vector<64x16xf32>
    %c0_2 = arith.constant 0 : index
    %c0_3 = arith.constant 0 : index
    %4 = vector.load %arg2[%c0_2, %c0_3] : memref<16x256xf32, #tpu.memory_space<vmem>>, vector<16x256xf32>
    %cst = arith.constant dense<0.000000e+00> : vector<64x256xf32>
    %5 = tpu.matmul %3, %4, %cst {dimension_numbers = #tpu.dot_dimension_numbers<[1], [0], [0], [1], [0, 0, 1, 1], [], []>} : vector<64x16xf32>, vector<16x256xf32>, vector<64x256xf32> -> vector<64x256xf32>
    %c0_4 = arith.constant 0 : index
    %c0_5 = arith.constant 0 : index
    %6 = vector.load %arg4[%c0_4, %c0_5] : memref<1x256xf32, #tpu.memory_space<vmem>>, vector<1x256xf32>
    %7 = vector.broadcast %6 : vector<1x256xf32> to vector<64x256xf32>
    %8 = arith.addf %5, %7 : vector<64x256xf32>
    %c0_6 = arith.constant 0 : index
    %c0_7 = arith.constant 0 : index
    %9 = vector.load %arg9[%c0_6, %c0_7] : memref<64x256xf32, #tpu.memory_space<vmem>>, vector<64x256xf32>
    tpu.vector_store %arg9[%c0_6, %c0_7], %8 {strides = array<i32>} : memref<64x256xf32, #tpu.memory_space<vmem>>, vector<64x256xf32>,
    %c0_8 = arith.constant 0 : index
    %c0_9 = arith.constant 0 : index
    %10 = vector.load %arg8[%c0_8, %c0_9] : memref<8x128xf32, #tpu.memory_space<vmem>>, vector<8x128xf32>
    %c0_i32_10 = arith.constant 0 : i32
    %c8_i32 = arith.constant 8 : i32
    %11 = arith.muli %c0_i32_10, %c8_i32 : i32
    %12 = tpu.assume_multiple %11, 8 : i32
    %13 = arith.index_cast %12 : i32 to index
    %c0_11 = arith.constant 0 : index
    %14 = vector.load %arg9[%13, %c0_11] : memref<64x256xf32, #tpu.memory_space<vmem>>, vector<8x256xf32>
    %c0_12 = arith.constant 0 : index
    %c0_13 = arith.constant 0 : index
    %15 = vector.load %arg3[%c0_12, %c0_13] : memref<128x256xf32, #tpu.memory_space<vmem>>, vector<128x256xf32>
    %cst_14 = arith.constant dense<0.000000e+00> : vector<8x256xf32>
    %16 = tpu.matmul %10, %15, %cst_14 {dimension_numbers = #tpu.dot_dimension_numbers<[1], [0], [0], [1], [0, 0, 1, 1], [], []>} : vector<8x128xf32>, vector<128x256xf32>, vector<8x256xf32> -> vector<8x256xf32>
    %17 = arith.addf %14, %16 : vector<8x256xf32>
    %18 = vector.extract_strided_slice %17 {offsets = [0, 0], sizes = [8, 128], strides = [1, 1]} : vector<8x256xf32> to vector<8x128xf32>
    %19 = vector.extract_strided_slice %17 {offsets = [0, 128], sizes = [8, 128], strides = [1, 1]} : vector<8x256xf32> to vector<8x128xf32>
    %cst_15 = arith.constant dense<0xFF800000> : vector<8xf32>
    %20 = vector.multi_reduction <maximumf>, %19, %cst_15 [1] : vector<8x128xf32> to vector<8xf32>
    %21 = vector.shape_cast %20 : vector<8xf32> to vector<8x1xf32>
    %22 = vector.broadcast %21 : vector<8x1xf32> to vector<8x128xf32>
    %23 = arith.subf %19, %22 : vector<8x128xf32>
    %24 = math.exp %23 : vector<8x128xf32>
    %cst_16 = arith.constant dense<0.000000e+00> : vector<8xf32>
    %25 = vector.multi_reduction <add>, %24, %cst_16 [1] : vector<8x128xf32> to vector<8xf32>
    %26 = vector.shape_cast %25 : vector<8xf32> to vector<8x1xf32>
    %27 = math.log %26 : vector<8x1xf32>
    %28 = vector.broadcast %27 : vector<8x1xf32> to vector<8x128xf32>
    %29 = arith.subf %23, %28 : vector<8x128xf32>
    %30 = arith.index_cast %12 : i32 to index
    %c0_17 = arith.constant 0 : index
    %31 = vector.load %arg6[%30, %c0_17] : memref<64x128xf32, #tpu.memory_space<vmem>>, vector<8x128xf32>
    tpu.vector_store %arg6[%30, %c0_17], %29 {strides = array<i32>} : memref<64x128xf32, #tpu.memory_space<vmem>>, vector<8x128xf32>,
    %c1_i32 = arith.constant 1 : i32
    %c8_i32_18 = arith.constant 8 : i32
    %32 = arith.muli %c1_i32, %c8_i32_18 : i32
    %33 = tpu.assume_multiple %32, 8 : i32
    %34 = arith.index_cast %33 : i32 to index
    %c0_19 = arith.constant 0 : index
    %35 = vector.load %arg9[%34, %c0_19] : memref<64x256xf32, #tpu.memory_space<vmem>>, vector<8x256xf32>
    %c0_20 = arith.constant 0 : index
    %c0_21 = arith.constant 0 : index
    %36 = vector.load %arg3[%c0_20, %c0_21] : memref<128x256xf32, #tpu.memory_space<vmem>>, vector<128x256xf32>
    %cst_22 = arith.constant dense<0.000000e+00> : vector<8x256xf32>
    %37 = tpu.matmul %18, %36, %cst_22 {dimension_numbers = #tpu.dot_dimension_numbers<[1], [0], [0], [1], [0, 0, 1, 1], [], []>} : vector<8x128xf32>, vector<128x256xf32>, vector<8x256xf32> -> vector<8x256xf32>
    %38 = arith.addf %35, %37 : vector<8x256xf32>
    %39 = vector.extract_strided_slice %38 {offsets = [0, 0], sizes = [8, 128], strides = [1, 1]} : vector<8x256xf32> to vector<8x128xf32>
    %40 = vector.extract_strided_slice %38 {offsets = [0, 128], sizes = [8, 128], strides = [1, 1]} : vector<8x256xf32> to vector<8x128xf32>
    %cst_23 = arith.constant dense<0xFF800000> : vector<8xf32>
    %41 = vector.multi_reduction <maximumf>, %40, %cst_23 [1] : vector<8x128xf32> to vector<8xf32>
    %42 = vector.shape_cast %41 : vector<8xf32> to vector<8x1xf32>
    %43 = vector.broadcast %42 : vector<8x1xf32> to vector<8x128xf32>
    %44 = arith.subf %40, %43 : vector<8x128xf32>
    %45 = math.exp %44 : vector<8x128xf32>
    %cst_24 = arith.constant dense<0.000000e+00> : vector<8xf32>
    %46 = vector.multi_reduction <add>, %45, %cst_24 [1] : vector<8x128xf32> to vector<8xf32>
    %47 = vector.shape_cast %46 : vector<8xf32> to vector<8x1xf32>
    %48 = math.log %47 : vector<8x1xf32>
    %49 = vector.broadcast %48 : vector<8x1xf32> to vector<8x128xf32>
    %50 = arith.subf %44, %49 : vector<8x128xf32>
    %51 = arith.index_cast %33 : i32 to index
    %c0_25 = arith.constant 0 : index
    %52 = vector.load %arg6[%51, %c0_25] : memref<64x128xf32, #tpu.memory_space<vmem>>, vector<8x128xf32>
    tpu.vector_store %arg6[%51, %c0_25], %50 {strides = array<i32>} : memref<64x128xf32, #tpu.memory_space<vmem>>, vector<8x128xf32>,
    %c2_i32 = arith.constant 2 : i32
    %c8_i32_26 = arith.constant 8 : i32
    %53 = arith.muli %c2_i32, %c8_i32_26 : i32
    %54 = tpu.assume_multiple %53, 8 : i32
    %55 = arith.index_cast %54 : i32 to index
    %c0_27 = arith.constant 0 : index
    %56 = vector.load %arg9[%55, %c0_27] : memref<64x256xf32, #tpu.memory_space<vmem>>, vector<8x256xf32>
    %c0_28 = arith.constant 0 : index
    %c0_29 = arith.constant 0 : index
    %57 = vector.load %arg3[%c0_28, %c0_29] : memref<128x256xf32, #tpu.memory_space<vmem>>, vector<128x256xf32>
    %cst_30 = arith.constant dense<0.000000e+00> : vector<8x256xf32>
    %58 = tpu.matmul %39, %57, %cst_30 {dimension_numbers = #tpu.dot_dimension_numbers<[1], [0], [0], [1], [0, 0, 1, 1], [], []>} : vector<8x128xf32>, vector<128x256xf32>, vector<8x256xf32> -> vector<8x256xf32>
    %59 = arith.addf %56, %58 : vector<8x256xf32>
    %60 = vector.extract_strided_slice %59 {offsets = [0, 0], sizes = [8, 128], strides = [1, 1]} : vector<8x256xf32> to vector<8x128xf32>
    %61 = vector.extract_strided_slice %59 {offsets = [0, 128], sizes = [8, 128], strides = [1, 1]} : vector<8x256xf32> to vector<8x128xf32>
    %cst_31 = arith.constant dense<0xFF800000> : vector<8xf32>
    %62 = vector.multi_reduction <maximumf>, %61, %cst_31 [1] : vector<8x128xf32> to vector<8xf32>
    %63 = vector.shape_cast %62 : vector<8xf32> to vector<8x1xf32>
    %64 = vector.broadcast %63 : vector<8x1xf32> to vector<8x128xf32>
    %65 = arith.subf %61, %64 : vector<8x128xf32>
    %66 = math.exp %65 : vector<8x128xf32>
    %cst_32 = arith.constant dense<0.000000e+00> : vector<8xf32>
    %67 = vector.multi_reduction <add>, %66, %cst_32 [1] : vector<8x128xf32> to vector<8xf32>
    %68 = vector.shape_cast %67 : vector<8xf32> to vector<8x1xf32>
    %69 = math.log %68 : vector<8x1xf32>
    %70 = vector.broadcast %69 : vector<8x1xf32> to vector<8x128xf32>
    %71 = arith.subf %65, %70 : vector<8x128xf32>
    %72 = arith.index_cast %54 : i32 to index
    %c0_33 = arith.constant 0 : index
    %73 = vector.load %arg6[%72, %c0_33] : memref<64x128xf32, #tpu.memory_space<vmem>>, vector<8x128xf32>
    tpu.vector_store %arg6[%72, %c0_33], %71 {strides = array<i32>} : memref<64x128xf32, #tpu.memory_space<vmem>>, vector<8x128xf32>,
    %c3_i32 = arith.constant 3 : i32
    %c8_i32_34 = arith.constant 8 : i32
    %74 = arith.muli %c3_i32, %c8_i32_34 : i32
    %75 = tpu.assume_multiple %74, 8 : i32
    %76 = arith.index_cast %75 : i32 to index
    %c0_35 = arith.constant 0 : index
    %77 = vector.load %arg9[%76, %c0_35] : memref<64x256xf32, #tpu.memory_space<vmem>>, vector<8x256xf32>
    %c0_36 = arith.constant 0 : index
    %c0_37 = arith.constant 0 : index
    %78 = vector.load %arg3[%c0_36, %c0_37] : memref<128x256xf32, #tpu.memory_space<vmem>>, vector<128x256xf32>
    %cst_38 = arith.constant dense<0.000000e+00> : vector<8x256xf32>
    %79 = tpu.matmul %60, %78, %cst_38 {dimension_numbers = #tpu.dot_dimension_numbers<[1], [0], [0], [1], [0, 0, 1, 1], [], []>} : vector<8x128xf32>, vector<128x256xf32>, vector<8x256xf32> -> vector<8x256xf32>
    %80 = arith.addf %77, %79 : vector<8x256xf32>
    %81 = vector.extract_strided_slice %80 {offsets = [0, 0], sizes = [8, 128], strides = [1, 1]} : vector<8x256xf32> to vector<8x128xf32>
    %82 = vector.extract_strided_slice %80 {offsets = [0, 128], sizes = [8, 128], strides = [1, 1]} : vector<8x256xf32> to vector<8x128xf32>
    %cst_39 = arith.constant dense<0xFF800000> : vector<8xf32>
    %83 = vector.multi_reduction <maximumf>, %82, %cst_39 [1] : vector<8x128xf32> to vector<8xf32>
    %84 = vector.shape_cast %83 : vector<8xf32> to vector<8x1xf32>
    %85 = vector.broadcast %84 : vector<8x1xf32> to vector<8x128xf32>
    %86 = arith.subf %82, %85 : vector<8x128xf32>
    %87 = math.exp %86 : vector<8x128xf32>
    %cst_40 = arith.constant dense<0.000000e+00> : vector<8xf32>
    %88 = vector.multi_reduction <add>, %87, %cst_40 [1] : vector<8x128xf32> to vector<8xf32>
    %89 = vector.shape_cast %88 : vector<8xf32> to vector<8x1xf32>
    %90 = math.log %89 : vector<8x1xf32>
    %91 = vector.broadcast %90 : vector<8x1xf32> to vector<8x128xf32>
    %92 = arith.subf %86, %91 : vector<8x128xf32>
    %93 = arith.index_cast %75 : i32 to index
    %c0_41 = arith.constant 0 : index
    %94 = vector.load %arg6[%93, %c0_41] : memref<64x128xf32, #tpu.memory_space<vmem>>, vector<8x128xf32>
    tpu.vector_store %arg6[%93, %c0_41], %92 {strides = array<i32>} : memref<64x128xf32, #tpu.memory_space<vmem>>, vector<8x128xf32>,
    %c4_i32 = arith.constant 4 : i32
    %c8_i32_42 = arith.constant 8 : i32
    %95 = arith.muli %c4_i32, %c8_i32_42 : i32
    %96 = tpu.assume_multiple %95, 8 : i32
    %97 = arith.index_cast %96 : i32 to index
    %c0_43 = arith.constant 0 : index
    %98 = vector.load %arg9[%97, %c0_43] : memref<64x256xf32, #tpu.memory_space<vmem>>, vector<8x256xf32>
    %c0_44 = arith.constant 0 : index
    %c0_45 = arith.constant 0 : index
    %99 = vector.load %arg3[%c0_44, %c0_45] : memref<128x256xf32, #tpu.memory_space<vmem>>, vector<128x256xf32>
    %cst_46 = arith.constant dense<0.000000e+00> : vector<8x256xf32>
    %100 = tpu.matmul %81, %99, %cst_46 {dimension_numbers = #tpu.dot_dimension_numbers<[1], [0], [0], [1], [0, 0, 1, 1], [], []>} : vector<8x128xf32>, vector<128x256xf32>, vector<8x256xf32> -> vector<8x256xf32>
    %101 = arith.addf %98, %100 : vector<8x256xf32>
    %102 = vector.extract_strided_slice %101 {offsets = [0, 0], sizes = [8, 128], strides = [1, 1]} : vector<8x256xf32> to vector<8x128xf32>
    %103 = vector.extract_strided_slice %101 {offsets = [0, 128], sizes = [8, 128], strides = [1, 1]} : vector<8x256xf32> to vector<8x128xf32>
    %cst_47 = arith.constant dense<0xFF800000> : vector<8xf32>
    %104 = vector.multi_reduction <maximumf>, %103, %cst_47 [1] : vector<8x128xf32> to vector<8xf32>
    %105 = vector.shape_cast %104 : vector<8xf32> to vector<8x1xf32>
    %106 = vector.broadcast %105 : vector<8x1xf32> to vector<8x128xf32>
    %107 = arith.subf %103, %106 : vector<8x128xf32>
    %108 = math.exp %107 : vector<8x128xf32>
    %cst_48 = arith.constant dense<0.000000e+00> : vector<8xf32>
    %109 = vector.multi_reduction <add>, %108, %cst_48 [1] : vector<8x128xf32> to vector<8xf32>
    %110 = vector.shape_cast %109 : vector<8xf32> to vector<8x1xf32>
    %111 = math.log %110 : vector<8x1xf32>
    %112 = vector.broadcast %111 : vector<8x1xf32> to vector<8x128xf32>
    %113 = arith.subf %107, %112 : vector<8x128xf32>
    %114 = arith.index_cast %96 : i32 to index
    %c0_49 = arith.constant 0 : index
    %115 = vector.load %arg6[%114, %c0_49] : memref<64x128xf32, #tpu.memory_space<vmem>>, vector<8x128xf32>
    tpu.vector_store %arg6[%114, %c0_49], %113 {strides = array<i32>} : memref<64x128xf32, #tpu.memory_space<vmem>>, vector<8x128xf32>,
    %c5_i32 = arith.constant 5 : i32
    %c8_i32_50 = arith.constant 8 : i32
    %116 = arith.muli %c5_i32, %c8_i32_50 : i32
    %117 = tpu.assume_multiple %116, 8 : i32
    %118 = arith.index_cast %117 : i32 to index
    %c0_51 = arith.constant 0 : index
    %119 = vector.load %arg9[%118, %c0_51] : memref<64x256xf32, #tpu.memory_space<vmem>>, vector<8x256xf32>
    %c0_52 = arith.constant 0 : index
    %c0_53 = arith.constant 0 : index
    %120 = vector.load %arg3[%c0_52, %c0_53] : memref<128x256xf32, #tpu.memory_space<vmem>>, vector<128x256xf32>
    %cst_54 = arith.constant dense<0.000000e+00> : vector<8x256xf32>
    %121 = tpu.matmul %102, %120, %cst_54 {dimension_numbers = #tpu.dot_dimension_numbers<[1], [0], [0], [1], [0, 0, 1, 1], [], []>} : vector<8x128xf32>, vector<128x256xf32>, vector<8x256xf32> -> vector<8x256xf32>
    %122 = arith.addf %119, %121 : vector<8x256xf32>
    %123 = vector.extract_strided_slice %122 {offsets = [0, 0], sizes = [8, 128], strides = [1, 1]} : vector<8x256xf32> to vector<8x128xf32>
    %124 = vector.extract_strided_slice %122 {offsets = [0, 128], sizes = [8, 128], strides = [1, 1]} : vector<8x256xf32> to vector<8x128xf32>
    %cst_55 = arith.constant dense<0xFF800000> : vector<8xf32>
    %125 = vector.multi_reduction <maximumf>, %124, %cst_55 [1] : vector<8x128xf32> to vector<8xf32>
    %126 = vector.shape_cast %125 : vector<8xf32> to vector<8x1xf32>
    %127 = vector.broadcast %126 : vector<8x1xf32> to vector<8x128xf32>
    %128 = arith.subf %124, %127 : vector<8x128xf32>
    %129 = math.exp %128 : vector<8x128xf32>
    %cst_56 = arith.constant dense<0.000000e+00> : vector<8xf32>
    %130 = vector.multi_reduction <add>, %129, %cst_56 [1] : vector<8x128xf32> to vector<8xf32>
    %131 = vector.shape_cast %130 : vector<8xf32> to vector<8x1xf32>
    %132 = math.log %131 : vector<8x1xf32>
    %133 = vector.broadcast %132 : vector<8x1xf32> to vector<8x128xf32>
    %134 = arith.subf %128, %133 : vector<8x128xf32>
    %135 = arith.index_cast %117 : i32 to index
    %c0_57 = arith.constant 0 : index
    %136 = vector.load %arg6[%135, %c0_57] : memref<64x128xf32, #tpu.memory_space<vmem>>, vector<8x128xf32>
    tpu.vector_store %arg6[%135, %c0_57], %134 {strides = array<i32>} : memref<64x128xf32, #tpu.memory_space<vmem>>, vector<8x128xf32>,
    %c6_i32 = arith.constant 6 : i32
    %c8_i32_58 = arith.constant 8 : i32
    %137 = arith.muli %c6_i32, %c8_i32_58 : i32
    %138 = tpu.assume_multiple %137, 8 : i32
    %139 = arith.index_cast %138 : i32 to index
    %c0_59 = arith.constant 0 : index
    %140 = vector.load %arg9[%139, %c0_59] : memref<64x256xf32, #tpu.memory_space<vmem>>, vector<8x256xf32>
    %c0_60 = arith.constant 0 : index
    %c0_61 = arith.constant 0 : index
    %141 = vector.load %arg3[%c0_60, %c0_61] : memref<128x256xf32, #tpu.memory_space<vmem>>, vector<128x256xf32>
    %cst_62 = arith.constant dense<0.000000e+00> : vector<8x256xf32>
    %142 = tpu.matmul %123, %141, %cst_62 {dimension_numbers = #tpu.dot_dimension_numbers<[1], [0], [0], [1], [0, 0, 1, 1], [], []>} : vector<8x128xf32>, vector<128x256xf32>, vector<8x256xf32> -> vector<8x256xf32>
    %143 = arith.addf %140, %142 : vector<8x256xf32>
    %144 = vector.extract_strided_slice %143 {offsets = [0, 0], sizes = [8, 128], strides = [1, 1]} : vector<8x256xf32> to vector<8x128xf32>
    %145 = vector.extract_strided_slice %143 {offsets = [0, 128], sizes = [8, 128], strides = [1, 1]} : vector<8x256xf32> to vector<8x128xf32>
    %cst_63 = arith.constant dense<0xFF800000> : vector<8xf32>
    %146 = vector.multi_reduction <maximumf>, %145, %cst_63 [1] : vector<8x128xf32> to vector<8xf32>
    %147 = vector.shape_cast %146 : vector<8xf32> to vector<8x1xf32>
    %148 = vector.broadcast %147 : vector<8x1xf32> to vector<8x128xf32>
    %149 = arith.subf %145, %148 : vector<8x128xf32>
    %150 = math.exp %149 : vector<8x128xf32>
    %cst_64 = arith.constant dense<0.000000e+00> : vector<8xf32>
    %151 = vector.multi_reduction <add>, %150, %cst_64 [1] : vector<8x128xf32> to vector<8xf32>
    %152 = vector.shape_cast %151 : vector<8xf32> to vector<8x1xf32>
    %153 = math.log %152 : vector<8x1xf32>
    %154 = vector.broadcast %153 : vector<8x1xf32> to vector<8x128xf32>
    %155 = arith.subf %149, %154 : vector<8x128xf32>
    %156 = arith.index_cast %138 : i32 to index
    %c0_65 = arith.constant 0 : index
    %157 = vector.load %arg6[%156, %c0_65] : memref<64x128xf32, #tpu.memory_space<vmem>>, vector<8x128xf32>
    tpu.vector_store %arg6[%156, %c0_65], %155 {strides = array<i32>} : memref<64x128xf32, #tpu.memory_space<vmem>>, vector<8x128xf32>,
    %c7_i32 = arith.constant 7 : i32
    %c8_i32_66 = arith.constant 8 : i32
    %158 = arith.muli %c7_i32, %c8_i32_66 : i32
    %159 = tpu.assume_multiple %158, 8 : i32
    %160 = arith.index_cast %159 : i32 to index
    %c0_67 = arith.constant 0 : index
    %161 = vector.load %arg9[%160, %c0_67] : memref<64x256xf32, #tpu.memory_space<vmem>>, vector<8x256xf32>
    %c0_68 = arith.constant 0 : index
    %c0_69 = arith.constant 0 : index
    %162 = vector.load %arg3[%c0_68, %c0_69] : memref<128x256xf32, #tpu.memory_space<vmem>>, vector<128x256xf32>
    %cst_70 = arith.constant dense<0.000000e+00> : vector<8x256xf32>
    %163 = tpu.matmul %144, %162, %cst_70 {dimension_numbers = #tpu.dot_dimension_numbers<[1], [0], [0], [1], [0, 0, 1, 1], [], []>} : vector<8x128xf32>, vector<128x256xf32>, vector<8x256xf32> -> vector<8x256xf32>
    %164 = arith.addf %161, %163 : vector<8x256xf32>
    %165 = vector.extract_strided_slice %164 {offsets = [0, 0], sizes = [8, 128], strides = [1, 1]} : vector<8x256xf32> to vector<8x128xf32>
    %166 = vector.extract_strided_slice %164 {offsets = [0, 128], sizes = [8, 128], strides = [1, 1]} : vector<8x256xf32> to vector<8x128xf32>
    %cst_71 = arith.constant dense<0xFF800000> : vector<8xf32>
    %167 = vector.multi_reduction <maximumf>, %166, %cst_71 [1] : vector<8x128xf32> to vector<8xf32>
    %168 = vector.shape_cast %167 : vector<8xf32> to vector<8x1xf32>
    %169 = vector.broadcast %168 : vector<8x1xf32> to vector<8x128xf32>
    %170 = arith.subf %166, %169 : vector<8x128xf32>
    %171 = math.exp %170 : vector<8x128xf32>
    %cst_72 = arith.constant dense<0.000000e+00> : vector<8xf32>
    %172 = vector.multi_reduction <add>, %171, %cst_72 [1] : vector<8x128xf32> to vector<8xf32>
    %173 = vector.shape_cast %172 : vector<8xf32> to vector<8x1xf32>
    %174 = math.log %173 : vector<8x1xf32>
    %175 = vector.broadcast %174 : vector<8x1xf32> to vector<8x128xf32>
    %176 = arith.subf %170, %175 : vector<8x128xf32>
    %177 = arith.index_cast %159 : i32 to index
    %c0_73 = arith.constant 0 : index
    %178 = vector.load %arg6[%177, %c0_73] : memref<64x128xf32, #tpu.memory_space<vmem>>, vector<8x128xf32>
    tpu.vector_store %arg6[%177, %c0_73], %176 {strides = array<i32>} : memref<64x128xf32, #tpu.memory_space<vmem>>, vector<8x128xf32>,
    %c8_i32_74 = arith.constant 8 : i32
    %c0_75 = arith.constant 0 : index
    %c0_76 = arith.constant 0 : index
    %179 = vector.load %arg8[%c0_75, %c0_76] : memref<8x128xf32, #tpu.memory_space<vmem>>, vector<8x128xf32>
    tpu.vector_store %arg8[%c0_75, %c0_76], %165 {strides = array<i32>} : memref<8x128xf32, #tpu.memory_space<vmem>>, vector<8x128xf32>,
    %c0_77 = arith.constant 0 : index
    %c0_78 = arith.constant 0 : index
    %180 = vector.load %arg7[%c0_77, %c0_78] : memref<8x128xf32, #tpu.memory_space<vmem>>, vector<8x128xf32>
    tpu.vector_store %arg7[%c0_77, %c0_78], %165 {strides = array<i32>} : memref<8x128xf32, #tpu.memory_space<vmem>>, vector<8x128xf32>,
    return
  }
  func.func @transform_0(%arg0: i32) -> (i32, i32) {
    %c0_i32 = arith.constant 0 : i32
    %c0_i32_0 = arith.constant 0 : i32
    return %arg0, %c0_i32 : i32, i32
  }
  func.func @transform_1(%arg0: i32) -> (i32, i32) {
    %c0_i32 = arith.constant 0 : i32
    %c0_i32_0 = arith.constant 0 : i32
    %c0_i32_1 = arith.constant 0 : i32
    return %c0_i32, %c0_i32_0 : i32, i32
  }
  func.func @transform_2(%arg0: i32) -> (i32, i32) {
    %c0_i32 = arith.constant 0 : i32
    %c0_i32_0 = arith.constant 0 : i32
    %c0_i32_1 = arith.constant 0 : i32
    return %c0_i32, %c0_i32_0 : i32, i32
  }
  func.func @transform_3(%arg0: i32) -> (i32, i32) {
    %c0_i32 = arith.constant 0 : i32
    %c0_i32_0 = arith.constant 0 : i32
    %c0_i32_1 = arith.constant 0 : i32
    return %c0_i32, %c0_i32_0 : i32, i32
  }
  func.func @transform_4(%arg0: i32) -> (i32, i32) {
    %c0_i32 = arith.constant 0 : i32
    %c0_i32_0 = arith.constant 0 : i32
    %c0_i32_1 = arith.constant 0 : i32
    return %c0_i32, %c0_i32_0 : i32, i32
  }
  func.func @transform_5(%arg0: i32) -> (i32, i32) {
    %c0_i32 = arith.constant 0 : i32
    %c0_i32_0 = arith.constant 0 : i32
    return %arg0, %c0_i32 : i32, i32
  }
  func.func @transform_6(%arg0: i32) -> (i32, i32) {
    %c0_i32 = arith.constant 0 : i32
    %c0_i32_0 = arith.constant 0 : i32
    %c0_i32_1 = arith.constant 0 : i32
    return %c0_i32, %c0_i32_0 : i32, i32
  }
}

</mosaic_0001>

<llo_original>
// kernel: rnn_forward_seq.1
$region0: #{rnn_forward_seq.1}
  #allocation0 [shape = 'u32[]', space=smem, size = 0x4, offset = 0x4, fixed_abs, tag = 'smem constant byte address 0x4 - core index']
  #allocation1 [shape = 'u32[144,128]{1,0:T(1,128)}', space=vmem, size = 0x12000, scoped, tag = 'internal scratch']
  #allocation2 [shape = 'f32[8,128]{1,0:T(8,128)}', space=vmem, size = 0x1000, scoped, tag = 'scratch operand']
  #allocation3 [shape = 'f32[64,256]{1,0:T(8,128)}', space=vmem, size = 0x10000, scoped, tag = 'scratch operand']
  %s0 = inlined_call_operand.vmem [shape: f32[64,16], index: 0, kind: input, shape index: {}]
  %s1 = inlined_call_operand.vmem [shape: f32[16,256], index: 1, kind: input, shape index: {}]
  %s2 = inlined_call_operand.vmem [shape: f32[128,256], index: 2, kind: input, shape index: {}]
  %s3 = inlined_call_operand.vmem [shape: f32[1,256], index: 3, kind: input, shape index: {}]
  %s4 = inlined_call_operand.vmem [shape: f32[8,128], index: 4, kind: input, shape index: {}]
  %s5 = inlined_call_operand.hbm [shape: f32[64,128], index: 5, kind: output, shape index: {0}]
  %s6 = inlined_call_operand.hbm [shape: f32[8,128], index: 6, kind: output, shape index: {1}]
  %7 = xla_tuple %s5, %s6
  %s8 = sld [smem:[#allocation0]]
  $region42: #{rnn_forward_seq.1} parent=0
    _
  %s10 = ssub.s32 1, %s8
  %s11 = scalar_select 0, %s10, %s8
  $region1: #{rnn_forward_seq.1} parent=0
    #allocation4 [shape = 'u8[32768]{0}', space=vmem, size = 0x8000, scoped, tag = 'output window, operand 0, single buffered']
    #allocation5 [shape = 's32[1]{0}', space=sflag, size = 0x4, scoped, tag = 'scoped memory for rnn_forward_seq.1']
    #allocation6 [shape = 'u8[4096]{0}', space=vmem, size = 0x1000, scoped, tag = 'output window, operand 1, single buffered']
    #allocation7 [shape = 's32[1]{0}', space=sflag, size = 0x4, scoped, tag = 'scoped memory for rnn_forward_seq.1']
    %12 = vsyncpa [#allocation5], 0
    %13 = vsyncpa [#allocation7], 0
    // Predicated region
    $region2: #{rnn_forward_seq.1} parent=1 // pred_check
      _
    $region3: #{rnn_forward_seq.1} parent=1 // pred_check_branch
      %15 = sbr.rel (0) target = $region5
    $region4: #{rnn_forward_seq.1} parent=1 // pred_region
      _
    $region5: #{rnn_forward_seq.1} parent=1 // pred_fallthru
      _
    // Predicated region
    $region6: #{rnn_forward_seq.1} parent=1 // pred_check
      _
    $region7: #{rnn_forward_seq.1} parent=1 // pred_check_branch
      %17 = sbr.rel (0) target = $region9
    $region8: #{rnn_forward_seq.1} parent=1 // pred_region
      _
    $region9: #{rnn_forward_seq.1} parent=1 // pred_fallthru
      _
    // Predicated region
    $region10: #{rnn_forward_seq.1} parent=1 // pred_check
      _
    $region11: #{rnn_forward_seq.1} parent=1 // pred_check_branch
      %19 = sbr.rel (0) target = $region13
    $region12: #{rnn_forward_seq.1} parent=1 // pred_region
      _
    $region13: #{rnn_forward_seq.1} parent=1 // pred_fallthru
      _
    // Predicated region
    $region14: #{rnn_forward_seq.1} parent=1 // pred_check
      _
    $region15: #{rnn_forward_seq.1} parent=1 // pred_check_branch
      %21 = sbr.rel (0) target = $region17
    $region16: #{rnn_forward_seq.1} parent=1 // pred_region
      _
    $region17: #{rnn_forward_seq.1} parent=1 // pred_fallthru
      _
    // Predicated region
    $region18: #{rnn_forward_seq.1} parent=1 // pred_check
      _
    $region19: #{rnn_forward_seq.1} parent=1 // pred_check_branch
      %23 = sbr.rel (0) target = $region21
    $region20: #{rnn_forward_seq.1} parent=1 // pred_region
      _
    $region21: #{rnn_forward_seq.1} parent=1 // pred_fallthru
      _
    %p24 = scmp.eq.s32.totalorder 0, 0
    // Predicated region
    $region22: #{rnn_forward_seq.1} parent=1 // pred_check
      %p25 = pneg %p24
    $region23: #{rnn_forward_seq.1} parent=1 // pred_check_branch
      %27 = sbr.rel (%p25) target = $region25
    $region24: #{rnn_forward_seq.1} parent=1 // pred_region
      %v28 = vld [vmem:[%s4] sm:$0xff]
      %29 = vst [vmem:[#allocation2] sm:$0xff] %v28
    $region25: #{rnn_forward_seq.1} parent=1 // pred_fallthru
      _
    %v30 = vld [vmem:[%s0] sm:$0xff]
    %v31 = vld [vmem:[%s0 + $0x8] sm:$0xff]
    %v32 = vld [vmem:[%s0 + $0x10] sm:$0xff]
    %v33 = vld [vmem:[%s0 + $0x18] sm:$0xff]
    %v34 = vld [vmem:[%s0 + $0x20] sm:$0xff]
    %v35 = vld [vmem:[%s0 + $0x28] sm:$0xff]
    %v36 = vld [vmem:[%s0 + $0x30] sm:$0xff]
    %v37 = vld [vmem:[%s0 + $0x38] sm:$0xff]
    %v38 = vld [vmem:[%s1] sm:$0xff]
    %v39 = vld [vmem:[%s1 + $0x8] sm:$0xff]
    %v40 = vld [vmem:[%s1 + $0x10] sm:$0xff]
    %v41 = vld [vmem:[%s1 + $0x18] sm:$0xff]
    %v42 = vld [vmem:[%s3] sm:$0x3]
    %v44 = vlaneseq
    %v45 = vshrl.u32 %v44, 7
    %v46 = vsub.s32 0, %v45
    %v47 = vrot.slane %v42, %v46
    %v48 = vlaneseq
    %v49 = vshrl.u32 %v48, 7
    %v50 = vsub.s32 1, %v49
    %v51 = vrot.slane %v42, %v50
    %vm54 = vcmask 130048
    %v56 = vsel %vm54, %v30, 0
    %v59 = vsel %vm54, %v31, 0
    %v62 = vsel %vm54, %v32, 0
    %v65 = vsel %vm54, %v33, 0
    %v68 = vsel %vm54, %v34, 0
    %v71 = vsel %vm54, %v35, 0
    %v74 = vsel %vm54, %v36, 0
    %v77 = vsel %vm54, %v37, 0
    %79 = vmatprep.subr.mxu0 %v39
    %80 = vmatpush1.msra.mxu0 %v38
    %81 = vmatprep.subr.mxu0 %v41
    %82 = vmatpush1.msra.mxu0 %v40
    %83 = vmatprep.subr.mxu0 0.0
    %84 = vmatpush1.msra.mxu0 0.0
    %85 = vmatprep.subr.mxu0 0.0
    %86 = vmatpush1.msra.mxu0 0.0
    %87 = vmatprep.subr.mxu0 0.0
    %88 = vmatpush1.msra.mxu0 0.0
    %89 = vmatprep.subr.mxu0 0.0
    %90 = vmatpush1.msra.mxu0 0.0
    %91 = vmatprep.subr.mxu0 0.0
    %92 = vmatpush1.msra.mxu0 0.0
    %93 = vmatprep.subr.mxu0 0.0
    %94 = vmatpush1.msra.mxu0 0.0
    %95 = vmatprep.subr.mxu0 0.0
    %96 = vmatpush1.msra.mxu0 0.0
    %97 = vmatprep.subr.mxu0 0.0
    %98 = vmatpush1.msra.mxu0 0.0
    %99 = vmatprep.subr.mxu0 0.0
    %100 = vmatpush1.msra.mxu0 0.0
    %101 = vmatprep.subr.mxu0 0.0
    %102 = vmatpush1.msra.mxu0 0.0
    %103 = vmatprep.subr.mxu0 0.0
    %104 = vmatpush1.msra.mxu0 0.0
    %105 = vmatprep.subr.mxu0 0.0
    %106 = vmatpush1.msra.mxu0 0.0
    %107 = vmatprep.subr.mxu0 0.0
    %108 = vmatpush1.msra.mxu0 0.0
    %109 = vmatprep.subr.mxu0 0.0
    %110 = vmatpush1.msra.mxu0 0.0
    %111 = vmatprep.subr.mxu0 0.0
    %112 = vmatpush1.msra.mxu0 0.0
    %113 = vmatprep.subr.mxu0 0.0
    %114 = vmatpush1.msra.mxu0 0.0
    %115 = vmatprep.subr.mxu0 0.0
    %116 = vmatpush1.msra.mxu0 0.0
    %117 = vmatprep.subr.mxu0 0.0
    %118 = vmatpush1.msra.mxu0 0.0
    %119 = vmatprep.subr.mxu0 0.0
    %120 = vmatpush1.msra.mxu0 0.0
    %121 = vmatprep.subr.mxu0 0.0
    %122 = vmatpush1.msra.mxu0 0.0
    %123 = vmatprep.subr.mxu0 0.0
    %124 = vmatpush1.msra.mxu0 0.0
    %125 = vmatprep.subr.mxu0 0.0
    %126 = vmatpush1.msra.mxu0 0.0
    %127 = vmatprep.subr.mxu0 0.0
    %128 = vmatpush1.msra.mxu0 0.0
    %129 = vmatprep.subr.mxu0 0.0
    %130 = vmatpush1.msra.mxu0 0.0
    %131 = vmatprep.subr.mxu0 0.0
    %132 = vmatpush1.msra.mxu0 0.0
    %133 = vmatprep.subr.mxu0 0.0
    %134 = vmatpush1.msra.mxu0 0.0
    %135 = vmatprep.subr.mxu0 0.0
    %136 = vmatpush1.msra.mxu0 0.0
    %137 = vmatprep.subr.mxu0 0.0
    %138 = vmatpush1.msra.mxu0 0.0
    %139 = vmatprep.subr.mxu0 0.0
    %140 = vmatpush1.msra.mxu0 0.0
    %141 = vmatprep.subr.mxu0 0.0
    %142 = vmatpush1.msra.mxu0 0.0
    %143 = vmatprep.mubr.f32.mxu0 0.0
    %144 = vmatmul.mubr.f32.gmra.mrb[0].mxu0 %v56
    %v145 = vpop.f32.mrb[0].mxu0
    %v146 = vadd.f32 %v47, %v145
    %v147 = vpop.f32.mrb[0].mxu0
    %v148 = vadd.f32 %v51, %v147
    %149 = vmatprep.mubr.f32.mxu0 0.0
    %150 = vmatmul.mubr.f32.gmra.mrb[0].mxu0 %v59
    %v151 = vpop.f32.mrb[0].mxu0
    %v152 = vadd.f32 %v47, %v151
    %v153 = vpop.f32.mrb[0].mxu0
    %v154 = vadd.f32 %v51, %v153
    %155 = vmatprep.mubr.f32.mxu0 0.0
    %156 = vmatmul.mubr.f32.gmra.mrb[0].mxu0 %v62
    %v157 = vpop.f32.mrb[0].mxu0
    %v158 = vadd.f32 %v47, %v157
    %v159 = vpop.f32.mrb[0].mxu0
    %v160 = vadd.f32 %v51, %v159
    %161 = vmatprep.mubr.f32.mxu0 0.0
    %162 = vmatmul.mubr.f32.gmra.mrb[0].mxu0 %v65
    %v163 = vpop.f32.mrb[0].mxu0
    %v164 = vadd.f32 %v47, %v163
    %v165 = vpop.f32.mrb[0].mxu0
    %v166 = vadd.f32 %v51, %v165
    %167 = vmatprep.mubr.f32.mxu0 0.0
    %168 = vmatmul.mubr.f32.gmra.mrb[0].mxu0 %v68
    %v169 = vpop.f32.mrb[0].mxu0
    %v170 = vadd.f32 %v47, %v169
    %v171 = vpop.f32.mrb[0].mxu0
    %v172 = vadd.f32 %v51, %v171
    %173 = vmatprep.mubr.f32.mxu0 0.0
    %174 = vmatmul.mubr.f32.gmra.mrb[0].mxu0 %v71
    %v175 = vpop.f32.mrb[0].mxu0
    %v176 = vadd.f32 %v47, %v175
    %v177 = vpop.f32.mrb[0].mxu0
    %v178 = vadd.f32 %v51, %v177
    %179 = vmatprep.mubr.f32.mxu0 0.0
    %180 = vmatmul.mubr.f32.gmra.mrb[0].mxu0 %v74
    %v181 = vpop.f32.mrb[0].mxu0
    %v182 = vadd.f32 %v47, %v181
    %v183 = vpop.f32.mrb[0].mxu0
    %v184 = vadd.f32 %v51, %v183
    %185 = vmatprep.mubr.f32.mxu0 0.0
    %186 = vmatmul.mubr.f32.gmra.mrb[0].mxu0 %v77
    %v187 = vpop.f32.mrb[0].mxu0
    %v188 = vadd.f32 %v47, %v187
    %v189 = vpop.f32.mrb[0].mxu0
    %v190 = vadd.f32 %v51, %v189
    %191 = vdwg.mxu0
    %192 = vst [vmem:[#allocation3] sm:$0xff] %v146
    %193 = vst [vmem:[#allocation3 + $0x8] sm:$0xff] %v148
    %194 = vst [vmem:[#allocation3 + $0x10] sm:$0xff] %v152
    %195 = vst [vmem:[#allocation3 + $0x18] sm:$0xff] %v154
    %196 = vst [vmem:[#allocation3 + $0x20] sm:$0xff] %v158
    %197 = vst [vmem:[#allocation3 + $0x28] sm:$0xff] %v160
    %198 = vst [vmem:[#allocation3 + $0x30] sm:$0xff] %v164
    %199 = vst [vmem:[#allocation3 + $0x38] sm:$0xff] %v166
    %200 = vst [vmem:[#allocation3 + $0x40] sm:$0xff] %v170
    %201 = vst [vmem:[#allocation3 + $0x48] sm:$0xff] %v172
    %202 = vst [vmem:[#allocation3 + $0x50] sm:$0xff] %v176
    %203 = vst [vmem:[#allocation3 + $0x58] sm:$0xff] %v178
    %204 = vst [vmem:[#allocation3 + $0x60] sm:$0xff] %v182
    %205 = vst [vmem:[#allocation3 + $0x68] sm:$0xff] %v184
    %206 = vst [vmem:[#allocation3 + $0x70] sm:$0xff] %v188
    %207 = vst [vmem:[#allocation3 + $0x78] sm:$0xff] %v190
    %v208 = vld [vmem:[#allocation2] sm:$0xff]
    %s209 = smul.u32 0, 2
    %s210 = smul.addr %s209, 8
    %s211 = scalar_lea.vmem [#allocation3], %s210
    %v212 = vld [vmem:[%s211] sm:$0xff]
    %v213 = vld [vmem:[%s211 + $0x8] sm:$0xff]
    %v214 = vld [vmem:[%s2] sm:$0xff]
    %v215 = vld [vmem:[%s2 + $0x8] sm:$0xff]
    %v216 = vld [vmem:[%s2 + $0x10] sm:$0xff]
    %v217 = vld [vmem:[%s2 + $0x18] sm:$0xff]
    %v218 = vld [vmem:[%s2 + $0x20] sm:$0xff]
    %v219 = vld [vmem:[%s2 + $0x28] sm:$0xff]
    %v220 = vld [vmem:[%s2 + $0x30] sm:$0xff]
    %v221 = vld [vmem:[%s2 + $0x38] sm:$0xff]
    %v222 = vld [vmem:[%s2 + $0x40] sm:$0xff]
    %v223 = vld [vmem:[%s2 + $0x48] sm:$0xff]
    %v224 = vld [vmem:[%s2 + $0x50] sm:$0xff]
    %v225 = vld [vmem:[%s2 + $0x58] sm:$0xff]
    %v226 = vld [vmem:[%s2 + $0x60] sm:$0xff]
    %v227 = vld [vmem:[%s2 + $0x68] sm:$0xff]
    %v228 = vld [vmem:[%s2 + $0x70] sm:$0xff]
    %v229 = vld [vmem:[%s2 + $0x78] sm:$0xff]
    %v230 = vld [vmem:[%s2 + $0x80] sm:$0xff]
    %v231 = vld [vmem:[%s2 + $0x88] sm:$0xff]
    %v232 = vld [vmem:[%s2 + $0x90] sm:$0xff]
    %v233 = vld [vmem:[%s2 + $0x98] sm:$0xff]
    %v234 = vld [vmem:[%s2 + $0xa0] sm:$0xff]
    %v235 = vld [vmem:[%s2 + $0xa8] sm:$0xff]
    %v236 = vld [vmem:[%s2 + $0xb0] sm:$0xff]
    %v237 = vld [vmem:[%s2 + $0xb8] sm:$0xff]
    %v238 = vld [vmem:[%s2 + $0xc0] sm:$0xff]
    %v239 = vld [vmem:[%s2 + $0xc8] sm:$0xff]
    %v240 = vld [vmem:[%s2 + $0xd0] sm:$0xff]
    %v241 = vld [vmem:[%s2 + $0xd8] sm:$0xff]
    %v242 = vld [vmem:[%s2 + $0xe0] sm:$0xff]
    %v243 = vld [vmem:[%s2 + $0xe8] sm:$0xff]
    %v244 = vld [vmem:[%s2 + $0xf0] sm:$0xff]
    %v245 = vld [vmem:[%s2 + $0xf8] sm:$0xff]
    %246 = vmatprep.subr.mxu0 %v215
    %247 = vmatpush1.msra.mxu0 %v214
    %248 = vmatprep.subr.mxu0 %v217
    %249 = vmatpush1.msra.mxu0 %v216
    %250 = vmatprep.subr.mxu0 %v219
    %251 = vmatpush1.msra.mxu0 %v218
    %252 = vmatprep.subr.mxu0 %v221
    %253 = vmatpush1.msra.mxu0 %v220
    %254 = vmatprep.subr.mxu0 %v223
    %255 = vmatpush1.msra.mxu0 %v222
    %256 = vmatprep.subr.mxu0 %v225
    %257 = vmatpush1.msra.mxu0 %v224
    %258 = vmatprep.subr.mxu0 %v227
    %259 = vmatpush1.msra.mxu0 %v226
    %260 = vmatprep.subr.mxu0 %v229
    %261 = vmatpush1.msra.mxu0 %v228
    %262 = vmatprep.subr.mxu0 %v231
    %263 = vmatpush1.msra.mxu0 %v230
    %264 = vmatprep.subr.mxu0 %v233
    %265 = vmatpush1.msra.mxu0 %v232
    %266 = vmatprep.subr.mxu0 %v235
    %267 = vmatpush1.msra.mxu0 %v234
    %268 = vmatprep.subr.mxu0 %v237
    %269 = vmatpush1.msra.mxu0 %v236
    %270 = vmatprep.subr.mxu0 %v239
    %271 = vmatpush1.msra.mxu0 %v238
    %272 = vmatprep.subr.mxu0 %v241
    %273 = vmatpush1.msra.mxu0 %v240
    %274 = vmatprep.subr.mxu0 %v243
    %275 = vmatpush1.msra.mxu0 %v242
    %276 = vmatprep.subr.mxu0 %v245
    %277 = vmatpush1.msra.mxu0 %v244
    %278 = vmatprep.subr.mxu0 0.0
    %279 = vmatpush1.msra.mxu0 0.0
    %280 = vmatprep.subr.mxu0 0.0
    %281 = vmatpush1.msra.mxu0 0.0
    %282 = vmatprep.subr.mxu0 0.0
    %283 = vmatpush1.msra.mxu0 0.0
    %284 = vmatprep.subr.mxu0 0.0
    %285 = vmatpush1.msra.mxu0 0.0
    %286 = vmatprep.subr.mxu0 0.0
    %287 = vmatpush1.msra.mxu0 0.0
    %288 = vmatprep.subr.mxu0 0.0
    %289 = vmatpush1.msra.mxu0 0.0
    %290 = vmatprep.subr.mxu0 0.0
    %291 = vmatpush1.msra.mxu0 0.0
    %292 = vmatprep.subr.mxu0 0.0
    %293 = vmatpush1.msra.mxu0 0.0
    %294 = vmatprep.subr.mxu0 0.0
    %295 = vmatpush1.msra.mxu0 0.0
    %296 = vmatprep.subr.mxu0 0.0
    %297 = vmatpush1.msra.mxu0 0.0
    %298 = vmatprep.subr.mxu0 0.0
    %299 = vmatpush1.msra.mxu0 0.0
    %300 = vmatprep.subr.mxu0 0.0
    %301 = vmatpush1.msra.mxu0 0.0
    %302 = vmatprep.subr.mxu0 0.0
    %303 = vmatpush1.msra.mxu0 0.0
    %304 = vmatprep.subr.mxu0 0.0
    %305 = vmatpush1.msra.mxu0 0.0
    %306 = vmatprep.subr.mxu0 0.0
    %307 = vmatpush1.msra.mxu0 0.0
    %308 = vmatprep.subr.mxu0 0.0
    %309 = vmatpush1.msra.mxu0 0.0
    %310 = vmatprep.mubr.f32.mxu0 0.0
    %311 = vmatmul.mubr.f32.gmra.mrb[0].mxu0 %v208
    %v312 = vpop.f32.mrb[0].mxu0
    %v313 = vadd.f32 0.0, %v312
    %v314 = vpop.f32.mrb[0].mxu0
    %v315 = vadd.f32 0.0, %v314
    %316 = vdwg.mxu0
    %v317 = vadd.f32 %v212, %v313
    %v318 = vadd.f32 %v213, %v315
    %319 = vmax.xlane.f32.xlu0 %v318
    %v320 = vpop.xlane.xlu0 %319
    %v321 = vsub.f32 %v318, %v320
    %v322 = vmul.f32 %v321, 1.442695
    %v323 = vpow.pop %v322
    %324 = vadd.xlane.f32.xlu0 %v323
    %v325 = vpop.xlane.xlu0 %324
    %v326 = vlog2.pop %v325
    %v327 = vmul.f32 %v326, 0.6931472
    %v328 = vsub.f32 %v321, %v327
    %329 = vst [vmem:[#allocation4] sm:$0xff] %v328
    %s330 = smul.u32 1, 2
    %s331 = smul.addr %s330, 8
    %s332 = scalar_lea.vmem [#allocation3], %s331
    %v333 = vld [vmem:[%s332] sm:$0xff]
    %v334 = vld [vmem:[%s332 + $0x8] sm:$0xff]
    %v335 = vld [vmem:[%s2] sm:$0xff]
    %v336 = vld [vmem:[%s2 + $0x8] sm:$0xff]
    %v337 = vld [vmem:[%s2 + $0x10] sm:$0xff]
    %v338 = vld [vmem:[%s2 + $0x18] sm:$0xff]
    %v339 = vld [vmem:[%s2 + $0x20] sm:$0xff]
    %v340 = vld [vmem:[%s2 + $0x28] sm:$0xff]
    %v341 = vld [vmem:[%s2 + $0x30] sm:$0xff]
    %v342 = vld [vmem:[%s2 + $0x38] sm:$0xff]
    %v343 = vld [vmem:[%s2 + $0x40] sm:$0xff]
    %v344 = vld [vmem:[%s2 + $0x48] sm:$0xff]
    %v345 = vld [vmem:[%s2 + $0x50] sm:$0xff]
    %v346 = vld [vmem:[%s2 + $0x58] sm:$0xff]
    %v347 = vld [vmem:[%s2 + $0x60] sm:$0xff]
    %v348 = vld [vmem:[%s2 + $0x68] sm:$0xff]
    %v349 = vld [vmem:[%s2 + $0x70] sm:$0xff]
    %v350 = vld [vmem:[%s2 + $0x78] sm:$0xff]
    %v351 = vld [vmem:[%s2 + $0x80] sm:$0xff]
    %v352 = vld [vmem:[%s2 + $0x88] sm:$0xff]
    %v353 = vld [vmem:[%s2 + $0x90] sm:$0xff]
    %v354 = vld [vmem:[%s2 + $0x98] sm:$0xff]
    %v355 = vld [vmem:[%s2 + $0xa0] sm:$0xff]
    %v356 = vld [vmem:[%s2 + $0xa8] sm:$0xff]
    %v357 = vld [vmem:[%s2 + $0xb0] sm:$0xff]
    %v358 = vld [vmem:[%s2 + $0xb8] sm:$0xff]
    %v359 = vld [vmem:[%s2 + $0xc0] sm:$0xff]
    %v360 = vld [vmem:[%s2 + $0xc8] sm:$0xff]
    %v361 = vld [vmem:[%s2 + $0xd0] sm:$0xff]
    %v362 = vld [vmem:[%s2 + $0xd8] sm:$0xff]
    %v363 = vld [vmem:[%s2 + $0xe0] sm:$0xff]
    %v364 = vld [vmem:[%s2 + $0xe8] sm:$0xff]
    %v365 = vld [vmem:[%s2 + $0xf0] sm:$0xff]
    %v366 = vld [vmem:[%s2 + $0xf8] sm:$0xff]
    %367 = vmatprep.subr.mxu0 %v336
    %368 = vmatpush1.msra.mxu0 %v335
    %369 = vmatprep.subr.mxu0 %v338
    %370 = vmatpush1.msra.mxu0 %v337
    %371 = vmatprep.subr.mxu0 %v340
    %372 = vmatpush1.msra.mxu0 %v339
    %373 = vmatprep.subr.mxu0 %v342
    %374 = vmatpush1.msra.mxu0 %v341
    %375 = vmatprep.subr.mxu0 %v344
    %376 = vmatpush1.msra.mxu0 %v343
    %377 = vmatprep.subr.mxu0 %v346
    %378 = vmatpush1.msra.mxu0 %v345
    %379 = vmatprep.subr.mxu0 %v348
    %380 = vmatpush1.msra.mxu0 %v347
    %381 = vmatprep.subr.mxu0 %v350
    %382 = vmatpush1.msra.mxu0 %v349
    %383 = vmatprep.subr.mxu0 %v352
    %384 = vmatpush1.msra.mxu0 %v351
    %385 = vmatprep.subr.mxu0 %v354
    %386 = vmatpush1.msra.mxu0 %v353
    %387 = vmatprep.subr.mxu0 %v356
    %388 = vmatpush1.msra.mxu0 %v355
    %389 = vmatprep.subr.mxu0 %v358
    %390 = vmatpush1.msra.mxu0 %v357
    %391 = vmatprep.subr.mxu0 %v360
    %392 = vmatpush1.msra.mxu0 %v359
    %393 = vmatprep.subr.mxu0 %v362
    %394 = vmatpush1.msra.mxu0 %v361
    %395 = vmatprep.subr.mxu0 %v364
    %396 = vmatpush1.msra.mxu0 %v363
    %397 = vmatprep.subr.mxu0 %v366
    %398 = vmatpush1.msra.mxu0 %v365
    %399 = vmatprep.subr.mxu0 0.0
    %400 = vmatpush1.msra.mxu0 0.0
    %401 = vmatprep.subr.mxu0 0.0
    %402 = vmatpush1.msra.mxu0 0.0
    %403 = vmatprep.subr.mxu0 0.0
    %404 = vmatpush1.msra.mxu0 0.0
    %405 = vmatprep.subr.mxu0 0.0
    %406 = vmatpush1.msra.mxu0 0.0
    %407 = vmatprep.subr.mxu0 0.0
    %408 = vmatpush1.msra.mxu0 0.0
    %409 = vmatprep.subr.mxu0 0.0
    %410 = vmatpush1.msra.mxu0 0.0
    %411 = vmatprep.subr.mxu0 0.0
    %412 = vmatpush1.msra.mxu0 0.0
    %413 = vmatprep.subr.mxu0 0.0
    %414 = vmatpush1.msra.mxu0 0.0
    %415 = vmatprep.subr.mxu0 0.0
    %416 = vmatpush1.msra.mxu0 0.0
    %417 = vmatprep.subr.mxu0 0.0
    %418 = vmatpush1.msra.mxu0 0.0
    %419 = vmatprep.subr.mxu0 0.0
    %420 = vmatpush1.msra.mxu0 0.0
    %421 = vmatprep.subr.mxu0 0.0
    %422 = vmatpush1.msra.mxu0 0.0
    %423 = vmatprep.subr.mxu0 0.0
    %424 = vmatpush1.msra.mxu0 0.0
    %425 = vmatprep.subr.mxu0 0.0
    %426 = vmatpush1.msra.mxu0 0.0
    %427 = vmatprep.subr.mxu0 0.0
    %428 = vmatpush1.msra.mxu0 0.0
    %429 = vmatprep.subr.mxu0 0.0
    %430 = vmatpush1.msra.mxu0 0.0
    %431 = vmatprep.mubr.f32.mxu0 0.0
    %432 = vmatmul.mubr.f32.gmra.mrb[0].mxu0 %v317
    %v433 = vpop.f32.mrb[0].mxu0
    %v434 = vadd.f32 0.0, %v433
    %v435 = vpop.f32.mrb[0].mxu0
    %v436 = vadd.f32 0.0, %v435
    %437 = vdwg.mxu0
    %v438 = vadd.f32 %v333, %v434
    %v439 = vadd.f32 %v334, %v436
    %440 = vmax.xlane.f32.xlu0 %v439
    %v441 = vpop.xlane.xlu0 %440
    %v442 = vsub.f32 %v439, %v441
    %v443 = vmul.f32 %v442, 1.442695
    %v444 = vpow.pop %v443
    %445 = vadd.xlane.f32.xlu0 %v444
    %v446 = vpop.xlane.xlu0 %445
    %v447 = vlog2.pop %v446
    %v448 = vmul.f32 %v447, 0.6931472
    %v449 = vsub.f32 %v442, %v448
    %s450 = scalar_lea.vmem [#allocation4], 8
    %451 = vst [vmem:[%s450] sm:$0xff] %v449
    %s452 = smul.u32 2, 2
    %s453 = smul.addr %s452, 8
    %s454 = scalar_lea.vmem [#allocation3], %s453
    %v455 = vld [vmem:[%s454] sm:$0xff]
    %v456 = vld [vmem:[%s454 + $0x8] sm:$0xff]
    %v457 = vld [vmem:[%s2] sm:$0xff]
    %v458 = vld [vmem:[%s2 + $0x8] sm:$0xff]
    %v459 = vld [vmem:[%s2 + $0x10] sm:$0xff]
    %v460 = vld [vmem:[%s2 + $0x18] sm:$0xff]
    %v461 = vld [vmem:[%s2 + $0x20] sm:$0xff]
    %v462 = vld [vmem:[%s2 + $0x28] sm:$0xff]
    %v463 = vld [vmem:[%s2 + $0x30] sm:$0xff]
    %v464 = vld [vmem:[%s2 + $0x38] sm:$0xff]
    %v465 = vld [vmem:[%s2 + $0x40] sm:$0xff]
    %v466 = vld [vmem:[%s2 + $0x48] sm:$0xff]
    %v467 = vld [vmem:[%s2 + $0x50] sm:$0xff]
    %v468 = vld [vmem:[%s2 + $0x58] sm:$0xff]
    %v469 = vld [vmem:[%s2 + $0x60] sm:$0xff]
    %v470 = vld [vmem:[%s2 + $0x68] sm:$0xff]
    %v471 = vld [vmem:[%s2 + $0x70] sm:$0xff]
    %v472 = vld [vmem:[%s2 + $0x78] sm:$0xff]
    %v473 = vld [vmem:[%s2 + $0x80] sm:$0xff]
    %v474 = vld [vmem:[%s2 + $0x88] sm:$0xff]
    %v475 = vld [vmem:[%s2 + $0x90] sm:$0xff]
    %v476 = vld [vmem:[%s2 + $0x98] sm:$0xff]
    %v477 = vld [vmem:[%s2 + $0xa0] sm:$0xff]
    %v478 = vld [vmem:[%s2 + $0xa8] sm:$0xff]
    %v479 = vld [vmem:[%s2 + $0xb0] sm:$0xff]
    %v480 = vld [vmem:[%s2 + $0xb8] sm:$0xff]
    %v481 = vld [vmem:[%s2 + $0xc0] sm:$0xff]
    %v482 = vld [vmem:[%s2 + $0xc8] sm:$0xff]
    %v483 = vld [vmem:[%s2 + $0xd0] sm:$0xff]
    %v484 = vld [vmem:[%s2 + $0xd8] sm:$0xff]
    %v485 = vld [vmem:[%s2 + $0xe0] sm:$0xff]
    %v486 = vld [vmem:[%s2 + $0xe8] sm:$0xff]
    %v487 = vld [vmem:[%s2 + $0xf0] sm:$0xff]
    %v488 = vld [vmem:[%s2 + $0xf8] sm:$0xff]
    %489 = vmatprep.subr.mxu0 %v458
    %490 = vmatpush1.msra.mxu0 %v457
    %491 = vmatprep.subr.mxu0 %v460
    %492 = vmatpush1.msra.mxu0 %v459
    %493 = vmatprep.subr.mxu0 %v462
    %494 = vmatpush1.msra.mxu0 %v461
    %495 = vmatprep.subr.mxu0 %v464
    %496 = vmatpush1.msra.mxu0 %v463
    %497 = vmatprep.subr.mxu0 %v466
    %498 = vmatpush1.msra.mxu0 %v465
    %499 = vmatprep.subr.mxu0 %v468
    %500 = vmatpush1.msra.mxu0 %v467
    %501 = vmatprep.subr.mxu0 %v470
    %502 = vmatpush1.msra.mxu0 %v469
    %503 = vmatprep.subr.mxu0 %v472
    %504 = vmatpush1.msra.mxu0 %v471
    %505 = vmatprep.subr.mxu0 %v474
    %506 = vmatpush1.msra.mxu0 %v473
    %507 = vmatprep.subr.mxu0 %v476
    %508 = vmatpush1.msra.mxu0 %v475
    %509 = vmatprep.subr.mxu0 %v478
    %510 = vmatpush1.msra.mxu0 %v477
    %511 = vmatprep.subr.mxu0 %v480
    %512 = vmatpush1.msra.mxu0 %v479
    %513 = vmatprep.subr.mxu0 %v482
    %514 = vmatpush1.msra.mxu0 %v481
    %515 = vmatprep.subr.mxu0 %v484
    %516 = vmatpush1.msra.mxu0 %v483
    %517 = vmatprep.subr.mxu0 %v486
    %518 = vmatpush1.msra.mxu0 %v485
    %519 = vmatprep.subr.mxu0 %v488
    %520 = vmatpush1.msra.mxu0 %v487
    %521 = vmatprep.subr.mxu0 0.0
    %522 = vmatpush1.msra.mxu0 0.0
    %523 = vmatprep.subr.mxu0 0.0
    %524 = vmatpush1.msra.mxu0 0.0
    %525 = vmatprep.subr.mxu0 0.0
    %526 = vmatpush1.msra.mxu0 0.0
    %527 = vmatprep.subr.mxu0 0.0
    %528 = vmatpush1.msra.mxu0 0.0
    %529 = vmatprep.subr.mxu0 0.0
    %530 = vmatpush1.msra.mxu0 0.0
    %531 = vmatprep.subr.mxu0 0.0
    %532 = vmatpush1.msra.mxu0 0.0
    %533 = vmatprep.subr.mxu0 0.0
    %534 = vmatpush1.msra.mxu0 0.0
    %535 = vmatprep.subr.mxu0 0.0
    %536 = vmatpush1.msra.mxu0 0.0
    %537 = vmatprep.subr.mxu0 0.0
    %538 = vmatpush1.msra.mxu0 0.0
    %539 = vmatprep.subr.mxu0 0.0
    %540 = vmatpush1.msra.mxu0 0.0
    %541 = vmatprep.subr.mxu0 0.0
    %542 = vmatpush1.msra.mxu0 0.0
    %543 = vmatprep.subr.mxu0 0.0
    %544 = vmatpush1.msra.mxu0 0.0
    %545 = vmatprep.subr.mxu0 0.0
    %546 = vmatpush1.msra.mxu0 0.0
    %547 = vmatprep.subr.mxu0 0.0
    %548 = vmatpush1.msra.mxu0 0.0
    %549 = vmatprep.subr.mxu0 0.0
    %550 = vmatpush1.msra.mxu0 0.0
    %551 = vmatprep.subr.mxu0 0.0
    %552 = vmatpush1.msra.mxu0 0.0
    %553 = vmatprep.mubr.f32.mxu0 0.0
    %554 = vmatmul.mubr.f32.gmra.mrb[0].mxu0 %v438
    %v555 = vpop.f32.mrb[0].mxu0
    %v556 = vadd.f32 0.0, %v555
    %v557 = vpop.f32.mrb[0].mxu0
    %v558 = vadd.f32 0.0, %v557
    %559 = vdwg.mxu0
    %v560 = vadd.f32 %v455, %v556
    %v561 = vadd.f32 %v456, %v558
    %562 = vmax.xlane.f32.xlu0 %v561
    %v563 = vpop.xlane.xlu0 %562
    %v564 = vsub.f32 %v561, %v563
    %v565 = vmul.f32 %v564, 1.442695
    %v566 = vpow.pop %v565
    %567 = vadd.xlane.f32.xlu0 %v566
    %v568 = vpop.xlane.xlu0 %567
    %v569 = vlog2.pop %v568
    %v570 = vmul.f32 %v569, 0.6931472
    %v571 = vsub.f32 %v564, %v570
    %s572 = scalar_lea.vmem [#allocation4], 16
    %573 = vst [vmem:[%s572] sm:$0xff] %v571
    %s574 = smul.u32 3, 2
    %s575 = smul.addr %s574, 8
    %s576 = scalar_lea.vmem [#allocation3], %s575
    %v577 = vld [vmem:[%s576] sm:$0xff]
    %v578 = vld [vmem:[%s576 + $0x8] sm:$0xff]
    %v579 = vld [vmem:[%s2] sm:$0xff]
    %v580 = vld [vmem:[%s2 + $0x8] sm:$0xff]
    %v581 = vld [vmem:[%s2 + $0x10] sm:$0xff]
    %v582 = vld [vmem:[%s2 + $0x18] sm:$0xff]
    %v583 = vld [vmem:[%s2 + $0x20] sm:$0xff]
    %v584 = vld [vmem:[%s2 + $0x28] sm:$0xff]
    %v585 = vld [vmem:[%s2 + $0x30] sm:$0xff]
    %v586 = vld [vmem:[%s2 + $0x38] sm:$0xff]
    %v587 = vld [vmem:[%s2 + $0x40] sm:$0xff]
    %v588 = vld [vmem:[%s2 + $0x48] sm:$0xff]
    %v589 = vld [vmem:[%s2 + $0x50] sm:$0xff]
    %v590 = vld [vmem:[%s2 + $0x58] sm:$0xff]
    %v591 = vld [vmem:[%s2 + $0x60] sm:$0xff]
    %v592 = vld [vmem:[%s2 + $0x68] sm:$0xff]
    %v593 = vld [vmem:[%s2 + $0x70] sm:$0xff]
    %v594 = vld [vmem:[%s2 + $0x78] sm:$0xff]
    %v595 = vld [vmem:[%s2 + $0x80] sm:$0xff]
    %v596 = vld [vmem:[%s2 + $0x88] sm:$0xff]
    %v597 = vld [vmem:[%s2 + $0x90] sm:$0xff]
    %v598 = vld [vmem:[%s2 + $0x98] sm:$0xff]
    %v599 = vld [vmem:[%s2 + $0xa0] sm:$0xff]
    %v600 = vld [vmem:[%s2 + $0xa8] sm:$0xff]
    %v601 = vld [vmem:[%s2 + $0xb0] sm:$0xff]
    %v602 = vld [vmem:[%s2 + $0xb8] sm:$0xff]
    %v603 = vld [vmem:[%s2 + $0xc0] sm:$0xff]
    %v604 = vld [vmem:[%s2 + $0xc8] sm:$0xff]
    %v605 = vld [vmem:[%s2 + $0xd0] sm:$0xff]
    %v606 = vld [vmem:[%s2 + $0xd8] sm:$0xff]
    %v607 = vld [vmem:[%s2 + $0xe0] sm:$0xff]
    %v608 = vld [vmem:[%s2 + $0xe8] sm:$0xff]
    %v609 = vld [vmem:[%s2 + $0xf0] sm:$0xff]
    %v610 = vld [vmem:[%s2 + $0xf8] sm:$0xff]
    %611 = vmatprep.subr.mxu0 %v580
    %612 = vmatpush1.msra.mxu0 %v579
    %613 = vmatprep.subr.mxu0 %v582
    %614 = vmatpush1.msra.mxu0 %v581
    %615 = vmatprep.subr.mxu0 %v584
    %616 = vmatpush1.msra.mxu0 %v583
    %617 = vmatprep.subr.mxu0 %v586
    %618 = vmatpush1.msra.mxu0 %v585
    %619 = vmatprep.subr.mxu0 %v588
    %620 = vmatpush1.msra.mxu0 %v587
    %621 = vmatprep.subr.mxu0 %v590
    %622 = vmatpush1.msra.mxu0 %v589
    %623 = vmatprep.subr.mxu0 %v592
    %624 = vmatpush1.msra.mxu0 %v591
    %625 = vmatprep.subr.mxu0 %v594
    %626 = vmatpush1.msra.mxu0 %v593
    %627 = vmatprep.subr.mxu0 %v596
    %628 = vmatpush1.msra.mxu0 %v595
    %629 = vmatprep.subr.mxu0 %v598
    %630 = vmatpush1.msra.mxu0 %v597
    %631 = vmatprep.subr.mxu0 %v600
    %632 = vmatpush1.msra.mxu0 %v599
    %633 = vmatprep.subr.mxu0 %v602
    %634 = vmatpush1.msra.mxu0 %v601
    %635 = vmatprep.subr.mxu0 %v604
    %636 = vmatpush1.msra.mxu0 %v603
    %637 = vmatprep.subr.mxu0 %v606
    %638 = vmatpush1.msra.mxu0 %v605
    %639 = vmatprep.subr.mxu0 %v608
    %640 = vmatpush1.msra.mxu0 %v607
    %641 = vmatprep.subr.mxu0 %v610
    %642 = vmatpush1.msra.mxu0 %v609
    %643 = vmatprep.subr.mxu0 0.0
    %644 = vmatpush1.msra.mxu0 0.0
    %645 = vmatprep.subr.mxu0 0.0
    %646 = vmatpush1.msra.mxu0 0.0
    %647 = vmatprep.subr.mxu0 0.0
    %648 = vmatpush1.msra.mxu0 0.0
    %649 = vmatprep.subr.mxu0 0.0
    %650 = vmatpush1.msra.mxu0 0.0
    %651 = vmatprep.subr.mxu0 0.0
    %652 = vmatpush1.msra.mxu0 0.0
    %653 = vmatprep.subr.mxu0 0.0
    %654 = vmatpush1.msra.mxu0 0.0
    %655 = vmatprep.subr.mxu0 0.0
    %656 = vmatpush1.msra.mxu0 0.0
    %657 = vmatprep.subr.mxu0 0.0
    %658 = vmatpush1.msra.mxu0 0.0
    %659 = vmatprep.subr.mxu0 0.0
    %660 = vmatpush1.msra.mxu0 0.0
    %661 = vmatprep.subr.mxu0 0.0
    %662 = vmatpush1.msra.mxu0 0.0
    %663 = vmatprep.subr.mxu0 0.0
    %664 = vmatpush1.msra.mxu0 0.0
    %665 = vmatprep.subr.mxu0 0.0
    %666 = vmatpush1.msra.mxu0 0.0
    %667 = vmatprep.subr.mxu0 0.0
    %668 = vmatpush1.msra.mxu0 0.0
    %669 = vmatprep.subr.mxu0 0.0
    %670 = vmatpush1.msra.mxu0 0.0
    %671 = vmatprep.subr.mxu0 0.0
    %672 = vmatpush1.msra.mxu0 0.0
    %673 = vmatprep.subr.mxu0 0.0
    %674 = vmatpush1.msra.mxu0 0.0
    %675 = vmatprep.mubr.f32.mxu0 0.0
    %676 = vmatmul.mubr.f32.gmra.mrb[0].mxu0 %v560
    %v677 = vpop.f32.mrb[0].mxu0
    %v678 = vadd.f32 0.0, %v677
    %v679 = vpop.f32.mrb[0].mxu0
    %v680 = vadd.f32 0.0, %v679
    %681 = vdwg.mxu0
    %v682 = vadd.f32 %v577, %v678
    %v683 = vadd.f32 %v578, %v680
    %684 = vmax.xlane.f32.xlu0 %v683
    %v685 = vpop.xlane.xlu0 %684
    %v686 = vsub.f32 %v683, %v685
    %v687 = vmul.f32 %v686, 1.442695
    %v688 = vpow.pop %v687
    %689 = vadd.xlane.f32.xlu0 %v688
    %v690 = vpop.xlane.xlu0 %689
    %v691 = vlog2.pop %v690
    %v692 = vmul.f32 %v691, 0.6931472
    %v693 = vsub.f32 %v686, %v692
    %s694 = scalar_lea.vmem [#allocation4], 24
    %695 = vst [vmem:[%s694] sm:$0xff] %v693
    %s696 = smul.u32 4, 2
    %s697 = smul.addr %s696, 8
    %s698 = scalar_lea.vmem [#allocation3], %s697
    %v699 = vld [vmem:[%s698] sm:$0xff]
    %v700 = vld [vmem:[%s698 + $0x8] sm:$0xff]
    %v701 = vld [vmem:[%s2] sm:$0xff]
    %v702 = vld [vmem:[%s2 + $0x8] sm:$0xff]
    %v703 = vld [vmem:[%s2 + $0x10] sm:$0xff]
    %v704 = vld [vmem:[%s2 + $0x18] sm:$0xff]
    %v705 = vld [vmem:[%s2 + $0x20] sm:$0xff]
    %v706 = vld [vmem:[%s2 + $0x28] sm:$0xff]
    %v707 = vld [vmem:[%s2 + $0x30] sm:$0xff]
    %v708 = vld [vmem:[%s2 + $0x38] sm:$0xff]
    %v709 = vld [vmem:[%s2 + $0x40] sm:$0xff]
    %v710 = vld [vmem:[%s2 + $0x48] sm:$0xff]
    %v711 = vld [vmem:[%s2 + $0x50] sm:$0xff]
    %v712 = vld [vmem:[%s2 + $0x58] sm:$0xff]
    %v713 = vld [vmem:[%s2 + $0x60] sm:$0xff]
    %v714 = vld [vmem:[%s2 + $0x68] sm:$0xff]
    %v715 = vld [vmem:[%s2 + $0x70] sm:$0xff]
    %v716 = vld [vmem:[%s2 + $0x78] sm:$0xff]
    %v717 = vld [vmem:[%s2 + $0x80] sm:$0xff]
    %v718 = vld [vmem:[%s2 + $0x88] sm:$0xff]
    %v719 = vld [vmem:[%s2 + $0x90] sm:$0xff]
    %v720 = vld [vmem:[%s2 + $0x98] sm:$0xff]
    %v721 = vld [vmem:[%s2 + $0xa0] sm:$0xff]
    %v722 = vld [vmem:[%s2 + $0xa8] sm:$0xff]
    %v723 = vld [vmem:[%s2 + $0xb0] sm:$0xff]
    %v724 = vld [vmem:[%s2 + $0xb8] sm:$0xff]
    %v725 = vld [vmem:[%s2 + $0xc0] sm:$0xff]
    %v726 = vld [vmem:[%s2 + $0xc8] sm:$0xff]
    %v727 = vld [vmem:[%s2 + $0xd0] sm:$0xff]
    %v728 = vld [vmem:[%s2 + $0xd8] sm:$0xff]
    %v729 = vld [vmem:[%s2 + $0xe0] sm:$0xff]
    %v730 = vld [vmem:[%s2 + $0xe8] sm:$0xff]
    %v731 = vld [vmem:[%s2 + $0xf0] sm:$0xff]
    %v732 = vld [vmem:[%s2 + $0xf8] sm:$0xff]
    %733 = vmatprep.subr.mxu0 %v702
    %734 = vmatpush1.msra.mxu0 %v701
    %735 = vmatprep.subr.mxu0 %v704
    %736 = vmatpush1.msra.mxu0 %v703
    %737 = vmatprep.subr.mxu0 %v706
    %738 = vmatpush1.msra.mxu0 %v705
    %739 = vmatprep.subr.mxu0 %v708
    %740 = vmatpush1.msra.mxu0 %v707
    %741 = vmatprep.subr.mxu0 %v710
    %742 = vmatpush1.msra.mxu0 %v709
    %743 = vmatprep.subr.mxu0 %v712
    %744 = vmatpush1.msra.mxu0 %v711
    %745 = vmatprep.subr.mxu0 %v714
    %746 = vmatpush1.msra.mxu0 %v713
    %747 = vmatprep.subr.mxu0 %v716
    %748 = vmatpush1.msra.mxu0 %v715
    %749 = vmatprep.subr.mxu0 %v718
    %750 = vmatpush1.msra.mxu0 %v717
    %751 = vmatprep.subr.mxu0 %v720
    %752 = vmatpush1.msra.mxu0 %v719
    %753 = vmatprep.subr.mxu0 %v722
    %754 = vmatpush1.msra.mxu0 %v721
    %755 = vmatprep.subr.mxu0 %v724
    %756 = vmatpush1.msra.mxu0 %v723
    %757 = vmatprep.subr.mxu0 %v726
    %758 = vmatpush1.msra.mxu0 %v725
    %759 = vmatprep.subr.mxu0 %v728
    %760 = vmatpush1.msra.mxu0 %v727
    %761 = vmatprep.subr.mxu0 %v730
    %762 = vmatpush1.msra.mxu0 %v729
    %763 = vmatprep.subr.mxu0 %v732
    %764 = vmatpush1.msra.mxu0 %v731
    %765 = vmatprep.subr.mxu0 0.0
    %766 = vmatpush1.msra.mxu0 0.0
    %767 = vmatprep.subr.mxu0 0.0
    %768 = vmatpush1.msra.mxu0 0.0
    %769 = vmatprep.subr.mxu0 0.0
    %770 = vmatpush1.msra.mxu0 0.0
    %771 = vmatprep.subr.mxu0 0.0
    %772 = vmatpush1.msra.mxu0 0.0
    %773 = vmatprep.subr.mxu0 0.0
    %774 = vmatpush1.msra.mxu0 0.0
    %775 = vmatprep.subr.mxu0 0.0
    %776 = vmatpush1.msra.mxu0 0.0
    %777 = vmatprep.subr.mxu0 0.0
    %778 = vmatpush1.msra.mxu0 0.0
    %779 = vmatprep.subr.mxu0 0.0
    %780 = vmatpush1.msra.mxu0 0.0
    %781 = vmatprep.subr.mxu0 0.0
    %782 = vmatpush1.msra.mxu0 0.0
    %783 = vmatprep.subr.mxu0 0.0
    %784 = vmatpush1.msra.mxu0 0.0
    %785 = vmatprep.subr.mxu0 0.0
    %786 = vmatpush1.msra.mxu0 0.0
    %787 = vmatprep.subr.mxu0 0.0
    %788 = vmatpush1.msra.mxu0 0.0
    %789 = vmatprep.subr.mxu0 0.0
    %790 = vmatpush1.msra.mxu0 0.0
    %791 = vmatprep.subr.mxu0 0.0
    %792 = vmatpush1.msra.mxu0 0.0
    %793 = vmatprep.subr.mxu0 0.0
    %794 = vmatpush1.msra.mxu0 0.0
    %795 = vmatprep.subr.mxu0 0.0
    %796 = vmatpush1.msra.mxu0 0.0
    %797 = vmatprep.mubr.f32.mxu0 0.0
    %798 = vmatmul.mubr.f32.gmra.mrb[0].mxu0 %v682
    %v799 = vpop.f32.mrb[0].mxu0
    %v800 = vadd.f32 0.0, %v799
    %v801 = vpop.f32.mrb[0].mxu0
    %v802 = vadd.f32 0.0, %v801
    %803 = vdwg.mxu0
    %v804 = vadd.f32 %v699, %v800
    %v805 = vadd.f32 %v700, %v802
    %806 = vmax.xlane.f32.xlu0 %v805
    %v807 = vpop.xlane.xlu0 %806
    %v808 = vsub.f32 %v805, %v807
    %v809 = vmul.f32 %v808, 1.442695
    %v810 = vpow.pop %v809
    %811 = vadd.xlane.f32.xlu0 %v810
    %v812 = vpop.xlane.xlu0 %811
    %v813 = vlog2.pop %v812
    %v814 = vmul.f32 %v813, 0.6931472
    %v815 = vsub.f32 %v808, %v814
    %s816 = scalar_lea.vmem [#allocation4], 32
    %817 = vst [vmem:[%s816] sm:$0xff] %v815
    %s818 = smul.u32 5, 2
    %s819 = smul.addr %s818, 8
    %s820 = scalar_lea.vmem [#allocation3], %s819
    %v821 = vld [vmem:[%s820] sm:$0xff]
    %v822 = vld [vmem:[%s820 + $0x8] sm:$0xff]
    %v823 = vld [vmem:[%s2] sm:$0xff]
    %v824 = vld [vmem:[%s2 + $0x8] sm:$0xff]
    %v825 = vld [vmem:[%s2 + $0x10] sm:$0xff]
    %v826 = vld [vmem:[%s2 + $0x18] sm:$0xff]
    %v827 = vld [vmem:[%s2 + $0x20] sm:$0xff]
    %v828 = vld [vmem:[%s2 + $0x28] sm:$0xff]
    %v829 = vld [vmem:[%s2 + $0x30] sm:$0xff]
    %v830 = vld [vmem:[%s2 + $0x38] sm:$0xff]
    %v831 = vld [vmem:[%s2 + $0x40] sm:$0xff]
    %v832 = vld [vmem:[%s2 + $0x48] sm:$0xff]
    %v833 = vld [vmem:[%s2 + $0x50] sm:$0xff]
    %v834 = vld [vmem:[%s2 + $0x58] sm:$0xff]
    %v835 = vld [vmem:[%s2 + $0x60] sm:$0xff]
    %v836 = vld [vmem:[%s2 + $0x68] sm:$0xff]
    %v837 = vld [vmem:[%s2 + $0x70] sm:$0xff]
    %v838 = vld [vmem:[%s2 + $0x78] sm:$0xff]
    %v839 = vld [vmem:[%s2 + $0x80] sm:$0xff]
    %v840 = vld [vmem:[%s2 + $0x88] sm:$0xff]
    %v841 = vld [vmem:[%s2 + $0x90] sm:$0xff]
    %v842 = vld [vmem:[%s2 + $0x98] sm:$0xff]
    %v843 = vld [vmem:[%s2 + $0xa0] sm:$0xff]
    %v844 = vld [vmem:[%s2 + $0xa8] sm:$0xff]
    %v845 = vld [vmem:[%s2 + $0xb0] sm:$0xff]
    %v846 = vld [vmem:[%s2 + $0xb8] sm:$0xff]
    %v847 = vld [vmem:[%s2 + $0xc0] sm:$0xff]
    %v848 = vld [vmem:[%s2 + $0xc8] sm:$0xff]
    %v849 = vld [vmem:[%s2 + $0xd0] sm:$0xff]
    %v850 = vld [vmem:[%s2 + $0xd8] sm:$0xff]
    %v851 = vld [vmem:[%s2 + $0xe0] sm:$0xff]
    %v852 = vld [vmem:[%s2 + $0xe8] sm:$0xff]
    %v853 = vld [vmem:[%s2 + $0xf0] sm:$0xff]
    %v854 = vld [vmem:[%s2 + $0xf8] sm:$0xff]
    %855 = vmatprep.subr.mxu0 %v824
    %856 = vmatpush1.msra.mxu0 %v823
    %857 = vmatprep.subr.mxu0 %v826
    %858 = vmatpush1.msra.mxu0 %v825
    %859 = vmatprep.subr.mxu0 %v828
    %860 = vmatpush1.msra.mxu0 %v827
    %861 = vmatprep.subr.mxu0 %v830
    %862 = vmatpush1.msra.mxu0 %v829
    %863 = vmatprep.subr.mxu0 %v832
    %864 = vmatpush1.msra.mxu0 %v831
    %865 = vmatprep.subr.mxu0 %v834
    %866 = vmatpush1.msra.mxu0 %v833
    %867 = vmatprep.subr.mxu0 %v836
    %868 = vmatpush1.msra.mxu0 %v835
    %869 = vmatprep.subr.mxu0 %v838
    %870 = vmatpush1.msra.mxu0 %v837
    %871 = vmatprep.subr.mxu0 %v840
    %872 = vmatpush1.msra.mxu0 %v839
    %873 = vmatprep.subr.mxu0 %v842
    %874 = vmatpush1.msra.mxu0 %v841
    %875 = vmatprep.subr.mxu0 %v844
    %876 = vmatpush1.msra.mxu0 %v843
    %877 = vmatprep.subr.mxu0 %v846
    %878 = vmatpush1.msra.mxu0 %v845
    %879 = vmatprep.subr.mxu0 %v848
    %880 = vmatpush1.msra.mxu0 %v847
    %881 = vmatprep.subr.mxu0 %v850
    %882 = vmatpush1.msra.mxu0 %v849
    %883 = vmatprep.subr.mxu0 %v852
    %884 = vmatpush1.msra.mxu0 %v851
    %885 = vmatprep.subr.mxu0 %v854
    %886 = vmatpush1.msra.mxu0 %v853
    %887 = vmatprep.subr.mxu0 0.0
    %888 = vmatpush1.msra.mxu0 0.0
    %889 = vmatprep.subr.mxu0 0.0
    %890 = vmatpush1.msra.mxu0 0.0
    %891 = vmatprep.subr.mxu0 0.0
    %892 = vmatpush1.msra.mxu0 0.0
    %893 = vmatprep.subr.mxu0 0.0
    %894 = vmatpush1.msra.mxu0 0.0
    %895 = vmatprep.subr.mxu0 0.0
    %896 = vmatpush1.msra.mxu0 0.0
    %897 = vmatprep.subr.mxu0 0.0
    %898 = vmatpush1.msra.mxu0 0.0
    %899 = vmatprep.subr.mxu0 0.0
    %900 = vmatpush1.msra.mxu0 0.0
    %901 = vmatprep.subr.mxu0 0.0
    %902 = vmatpush1.msra.mxu0 0.0
    %903 = vmatprep.subr.mxu0 0.0
    %904 = vmatpush1.msra.mxu0 0.0
    %905 = vmatprep.subr.mxu0 0.0
    %906 = vmatpush1.msra.mxu0 0.0
    %907 = vmatprep.subr.mxu0 0.0
    %908 = vmatpush1.msra.mxu0 0.0
    %909 = vmatprep.subr.mxu0 0.0
    %910 = vmatpush1.msra.mxu0 0.0
    %911 = vmatprep.subr.mxu0 0.0
    %912 = vmatpush1.msra.mxu0 0.0
    %913 = vmatprep.subr.mxu0 0.0
    %914 = vmatpush1.msra.mxu0 0.0
    %915 = vmatprep.subr.mxu0 0.0
    %916 = vmatpush1.msra.mxu0 0.0
    %917 = vmatprep.subr.mxu0 0.0
    %918 = vmatpush1.msra.mxu0 0.0
    %919 = vmatprep.mubr.f32.mxu0 0.0
    %920 = vmatmul.mubr.f32.gmra.mrb[0].mxu0 %v804
    %v921 = vpop.f32.mrb[0].mxu0
    %v922 = vadd.f32 0.0, %v921
    %v923 = vpop.f32.mrb[0].mxu0
    %v924 = vadd.f32 0.0, %v923
    %925 = vdwg.mxu0
    %v926 = vadd.f32 %v821, %v922
    %v927 = vadd.f32 %v822, %v924
    %928 = vmax.xlane.f32.xlu0 %v927
    %v929 = vpop.xlane.xlu0 %928
    %v930 = vsub.f32 %v927, %v929
    %v931 = vmul.f32 %v930, 1.442695
    %v932 = vpow.pop %v931
    %933 = vadd.xlane.f32.xlu0 %v932
    %v934 = vpop.xlane.xlu0 %933
    %v935 = vlog2.pop %v934
    %v936 = vmul.f32 %v935, 0.6931472
    %v937 = vsub.f32 %v930, %v936
    %s938 = scalar_lea.vmem [#allocation4], 40
    %939 = vst [vmem:[%s938] sm:$0xff] %v937
    %s940 = smul.u32 6, 2
    %s941 = smul.addr %s940, 8
    %s942 = scalar_lea.vmem [#allocation3], %s941
    %v943 = vld [vmem:[%s942] sm:$0xff]
    %v944 = vld [vmem:[%s942 + $0x8] sm:$0xff]
    %v945 = vld [vmem:[%s2] sm:$0xff]
    %v946 = vld [vmem:[%s2 + $0x8] sm:$0xff]
    %v947 = vld [vmem:[%s2 + $0x10] sm:$0xff]
    %v948 = vld [vmem:[%s2 + $0x18] sm:$0xff]
    %v949 = vld [vmem:[%s2 + $0x20] sm:$0xff]
    %v950 = vld [vmem:[%s2 + $0x28] sm:$0xff]
    %v951 = vld [vmem:[%s2 + $0x30] sm:$0xff]
    %v952 = vld [vmem:[%s2 + $0x38] sm:$0xff]
    %v953 = vld [vmem:[%s2 + $0x40] sm:$0xff]
    %v954 = vld [vmem:[%s2 + $0x48] sm:$0xff]
    %v955 = vld [vmem:[%s2 + $0x50] sm:$0xff]
    %v956 = vld [vmem:[%s2 + $0x58] sm:$0xff]
    %v957 = vld [vmem:[%s2 + $0x60] sm:$0xff]
    %v958 = vld [vmem:[%s2 + $0x68] sm:$0xff]
    %v959 = vld [vmem:[%s2 + $0x70] sm:$0xff]
    %v960 = vld [vmem:[%s2 + $0x78] sm:$0xff]
    %v961 = vld [vmem:[%s2 + $0x80] sm:$0xff]
    %v962 = vld [vmem:[%s2 + $0x88] sm:$0xff]
    %v963 = vld [vmem:[%s2 + $0x90] sm:$0xff]
    %v964 = vld [vmem:[%s2 + $0x98] sm:$0xff]
    %v965 = vld [vmem:[%s2 + $0xa0] sm:$0xff]
    %v966 = vld [vmem:[%s2 + $0xa8] sm:$0xff]
    %v967 = vld [vmem:[%s2 + $0xb0] sm:$0xff]
    %v968 = vld [vmem:[%s2 + $0xb8] sm:$0xff]
    %v969 = vld [vmem:[%s2 + $0xc0] sm:$0xff]
    %v970 = vld [vmem:[%s2 + $0xc8] sm:$0xff]
    %v971 = vld [vmem:[%s2 + $0xd0] sm:$0xff]
    %v972 = vld [vmem:[%s2 + $0xd8] sm:$0xff]
    %v973 = vld [vmem:[%s2 + $0xe0] sm:$0xff]
    %v974 = vld [vmem:[%s2 + $0xe8] sm:$0xff]
    %v975 = vld [vmem:[%s2 + $0xf0] sm:$0xff]
    %v976 = vld [vmem:[%s2 + $0xf8] sm:$0xff]
    %977 = vmatprep.subr.mxu0 %v946
    %978 = vmatpush1.msra.mxu0 %v945
    %979 = vmatprep.subr.mxu0 %v948
    %980 = vmatpush1.msra.mxu0 %v947
    %981 = vmatprep.subr.mxu0 %v950
    %982 = vmatpush1.msra.mxu0 %v949
    %983 = vmatprep.subr.mxu0 %v952
    %984 = vmatpush1.msra.mxu0 %v951
    %985 = vmatprep.subr.mxu0 %v954
    %986 = vmatpush1.msra.mxu0 %v953
    %987 = vmatprep.subr.mxu0 %v956
    %988 = vmatpush1.msra.mxu0 %v955
    %989 = vmatprep.subr.mxu0 %v958
    %990 = vmatpush1.msra.mxu0 %v957
    %991 = vmatprep.subr.mxu0 %v960
    %992 = vmatpush1.msra.mxu0 %v959
    %993 = vmatprep.subr.mxu0 %v962
    %994 = vmatpush1.msra.mxu0 %v961
    %995 = vmatprep.subr.mxu0 %v964
    %996 = vmatpush1.msra.mxu0 %v963
    %997 = vmatprep.subr.mxu0 %v966
    %998 = vmatpush1.msra.mxu0 %v965
    %999 = vmatprep.subr.mxu0 %v968
    %1000 = vmatpush1.msra.mxu0 %v967
    %1001 = vmatprep.subr.mxu0 %v970
    %1002 = vmatpush1.msra.mxu0 %v969
    %1003 = vmatprep.subr.mxu0 %v972
    %1004 = vmatpush1.msra.mxu0 %v971
    %1005 = vmatprep.subr.mxu0 %v974
    %1006 = vmatpush1.msra.mxu0 %v973
    %1007 = vmatprep.subr.mxu0 %v976
    %1008 = vmatpush1.msra.mxu0 %v975
    %1009 = vmatprep.subr.mxu0 0.0
    %1010 = vmatpush1.msra.mxu0 0.0
    %1011 = vmatprep.subr.mxu0 0.0
    %1012 = vmatpush1.msra.mxu0 0.0
    %1013 = vmatprep.subr.mxu0 0.0
    %1014 = vmatpush1.msra.mxu0 0.0
    %1015 = vmatprep.subr.mxu0 0.0
    %1016 = vmatpush1.msra.mxu0 0.0
    %1017 = vmatprep.subr.mxu0 0.0
    %1018 = vmatpush1.msra.mxu0 0.0
    %1019 = vmatprep.subr.mxu0 0.0
    %1020 = vmatpush1.msra.mxu0 0.0
    %1021 = vmatprep.subr.mxu0 0.0
    %1022 = vmatpush1.msra.mxu0 0.0
    %1023 = vmatprep.subr.mxu0 0.0
    %1024 = vmatpush1.msra.mxu0 0.0
    %1025 = vmatprep.subr.mxu0 0.0
    %1026 = vmatpush1.msra.mxu0 0.0
    %1027 = vmatprep.subr.mxu0 0.0
    %1028 = vmatpush1.msra.mxu0 0.0
    %1029 = vmatprep.subr.mxu0 0.0
    %1030 = vmatpush1.msra.mxu0 0.0
    %1031 = vmatprep.subr.mxu0 0.0
    %1032 = vmatpush1.msra.mxu0 0.0
    %1033 = vmatprep.subr.mxu0 0.0
    %1034 = vmatpush1.msra.mxu0 0.0
    %1035 = vmatprep.subr.mxu0 0.0
    %1036 = vmatpush1.msra.mxu0 0.0
    %1037 = vmatprep.subr.mxu0 0.0
    %1038 = vmatpush1.msra.mxu0 0.0
    %1039 = vmatprep.subr.mxu0 0.0
    %1040 = vmatpush1.msra.mxu0 0.0
    %1041 = vmatprep.mubr.f32.mxu0 0.0
    %1042 = vmatmul.mubr.f32.gmra.mrb[0].mxu0 %v926
    %v1043 = vpop.f32.mrb[0].mxu0
    %v1044 = vadd.f32 0.0, %v1043
    %v1045 = vpop.f32.mrb[0].mxu0
    %v1046 = vadd.f32 0.0, %v1045
    %1047 = vdwg.mxu0
    %v1048 = vadd.f32 %v943, %v1044
    %v1049 = vadd.f32 %v944, %v1046
    %1050 = vmax.xlane.f32.xlu0 %v1049
    %v1051 = vpop.xlane.xlu0 %1050
    %v1052 = vsub.f32 %v1049, %v1051
    %v1053 = vmul.f32 %v1052, 1.442695
    %v1054 = vpow.pop %v1053
    %1055 = vadd.xlane.f32.xlu0 %v1054
    %v1056 = vpop.xlane.xlu0 %1055
    %v1057 = vlog2.pop %v1056
    %v1058 = vmul.f32 %v1057, 0.6931472
    %v1059 = vsub.f32 %v1052, %v1058
    %s1060 = scalar_lea.vmem [#allocation4], 48
    %1061 = vst [vmem:[%s1060] sm:$0xff] %v1059
    %s1062 = smul.u32 7, 2
    %s1063 = smul.addr %s1062, 8
    %s1064 = scalar_lea.vmem [#allocation3], %s1063
    %v1065 = vld [vmem:[%s1064] sm:$0xff]
    %v1066 = vld [vmem:[%s1064 + $0x8] sm:$0xff]
    %v1067 = vld [vmem:[%s2] sm:$0xff]
    %v1068 = vld [vmem:[%s2 + $0x8] sm:$0xff]
    %v1069 = vld [vmem:[%s2 + $0x10] sm:$0xff]
    %v1070 = vld [vmem:[%s2 + $0x18] sm:$0xff]
    %v1071 = vld [vmem:[%s2 + $0x20] sm:$0xff]
    %v1072 = vld [vmem:[%s2 + $0x28] sm:$0xff]
    %v1073 = vld [vmem:[%s2 + $0x30] sm:$0xff]
    %v1074 = vld [vmem:[%s2 + $0x38] sm:$0xff]
    %v1075 = vld [vmem:[%s2 + $0x40] sm:$0xff]
    %v1076 = vld [vmem:[%s2 + $0x48] sm:$0xff]
    %v1077 = vld [vmem:[%s2 + $0x50] sm:$0xff]
    %v1078 = vld [vmem:[%s2 + $0x58] sm:$0xff]
    %v1079 = vld [vmem:[%s2 + $0x60] sm:$0xff]
    %v1080 = vld [vmem:[%s2 + $0x68] sm:$0xff]
    %v1081 = vld [vmem:[%s2 + $0x70] sm:$0xff]
    %v1082 = vld [vmem:[%s2 + $0x78] sm:$0xff]
    %v1083 = vld [vmem:[%s2 + $0x80] sm:$0xff]
    %v1084 = vld [vmem:[%s2 + $0x88] sm:$0xff]
    %v1085 = vld [vmem:[%s2 + $0x90] sm:$0xff]
    %v1086 = vld [vmem:[%s2 + $0x98] sm:$0xff]
    %v1087 = vld [vmem:[%s2 + $0xa0] sm:$0xff]
    %v1088 = vld [vmem:[%s2 + $0xa8] sm:$0xff]
    %v1089 = vld [vmem:[%s2 + $0xb0] sm:$0xff]
    %v1090 = vld [vmem:[%s2 + $0xb8] sm:$0xff]
    %v1091 = vld [vmem:[%s2 + $0xc0] sm:$0xff]
    %v1092 = vld [vmem:[%s2 + $0xc8] sm:$0xff]
    %v1093 = vld [vmem:[%s2 + $0xd0] sm:$0xff]
    %v1094 = vld [vmem:[%s2 + $0xd8] sm:$0xff]
    %v1095 = vld [vmem:[%s2 + $0xe0] sm:$0xff]
    %v1096 = vld [vmem:[%s2 + $0xe8] sm:$0xff]
    %v1097 = vld [vmem:[%s2 + $0xf0] sm:$0xff]
    %v1098 = vld [vmem:[%s2 + $0xf8] sm:$0xff]
    %1099 = vmatprep.subr.mxu0 %v1068
    %1100 = vmatpush1.msra.mxu0 %v1067
    %1101 = vmatprep.subr.mxu0 %v1070
    %1102 = vmatpush1.msra.mxu0 %v1069
    %1103 = vmatprep.subr.mxu0 %v1072
    %1104 = vmatpush1.msra.mxu0 %v1071
    %1105 = vmatprep.subr.mxu0 %v1074
    %1106 = vmatpush1.msra.mxu0 %v1073
    %1107 = vmatprep.subr.mxu0 %v1076
    %1108 = vmatpush1.msra.mxu0 %v1075
    %1109 = vmatprep.subr.mxu0 %v1078
    %1110 = vmatpush1.msra.mxu0 %v1077
    %1111 = vmatprep.subr.mxu0 %v1080
    %1112 = vmatpush1.msra.mxu0 %v1079
    %1113 = vmatprep.subr.mxu0 %v1082
    %1114 = vmatpush1.msra.mxu0 %v1081
    %1115 = vmatprep.subr.mxu0 %v1084
    %1116 = vmatpush1.msra.mxu0 %v1083
    %1117 = vmatprep.subr.mxu0 %v1086
    %1118 = vmatpush1.msra.mxu0 %v1085
    %1119 = vmatprep.subr.mxu0 %v1088
    %1120 = vmatpush1.msra.mxu0 %v1087
    %1121 = vmatprep.subr.mxu0 %v1090
    %1122 = vmatpush1.msra.mxu0 %v1089
    %1123 = vmatprep.subr.mxu0 %v1092
    %1124 = vmatpush1.msra.mxu0 %v1091
    %1125 = vmatprep.subr.mxu0 %v1094
    %1126 = vmatpush1.msra.mxu0 %v1093
    %1127 = vmatprep.subr.mxu0 %v1096
    %1128 = vmatpush1.msra.mxu0 %v1095
    %1129 = vmatprep.subr.mxu0 %v1098
    %1130 = vmatpush1.msra.mxu0 %v1097
    %1131 = vmatprep.subr.mxu0 0.0
    %1132 = vmatpush1.msra.mxu0 0.0
    %1133 = vmatprep.subr.mxu0 0.0
    %1134 = vmatpush1.msra.mxu0 0.0
    %1135 = vmatprep.subr.mxu0 0.0
    %1136 = vmatpush1.msra.mxu0 0.0
    %1137 = vmatprep.subr.mxu0 0.0
    %1138 = vmatpush1.msra.mxu0 0.0
    %1139 = vmatprep.subr.mxu0 0.0
    %1140 = vmatpush1.msra.mxu0 0.0
    %1141 = vmatprep.subr.mxu0 0.0
    %1142 = vmatpush1.msra.mxu0 0.0
    %1143 = vmatprep.subr.mxu0 0.0
    %1144 = vmatpush1.msra.mxu0 0.0
    %1145 = vmatprep.subr.mxu0 0.0
    %1146 = vmatpush1.msra.mxu0 0.0
    %1147 = vmatprep.subr.mxu0 0.0
    %1148 = vmatpush1.msra.mxu0 0.0
    %1149 = vmatprep.subr.mxu0 0.0
    %1150 = vmatpush1.msra.mxu0 0.0
    %1151 = vmatprep.subr.mxu0 0.0
    %1152 = vmatpush1.msra.mxu0 0.0
    %1153 = vmatprep.subr.mxu0 0.0
    %1154 = vmatpush1.msra.mxu0 0.0
    %1155 = vmatprep.subr.mxu0 0.0
    %1156 = vmatpush1.msra.mxu0 0.0
    %1157 = vmatprep.subr.mxu0 0.0
    %1158 = vmatpush1.msra.mxu0 0.0
    %1159 = vmatprep.subr.mxu0 0.0
    %1160 = vmatpush1.msra.mxu0 0.0
    %1161 = vmatprep.subr.mxu0 0.0
    %1162 = vmatpush1.msra.mxu0 0.0
    %1163 = vmatprep.mubr.f32.mxu0 0.0
    %1164 = vmatmul.mubr.f32.gmra.mrb[0].mxu0 %v1048
    %v1165 = vpop.f32.mrb[0].mxu0
    %v1166 = vadd.f32 0.0, %v1165
    %v1167 = vpop.f32.mrb[0].mxu0
    %v1168 = vadd.f32 0.0, %v1167
    %1169 = vdwg.mxu0
    %v1170 = vadd.f32 %v1065, %v1166
    %v1171 = vadd.f32 %v1066, %v1168
    %1172 = vmax.xlane.f32.xlu0 %v1171
    %v1173 = vpop.xlane.xlu0 %1172
    %v1174 = vsub.f32 %v1171, %v1173
    %v1175 = vmul.f32 %v1174, 1.442695
    %v1176 = vpow.pop %v1175
    %1177 = vadd.xlane.f32.xlu0 %v1176
    %v1178 = vpop.xlane.xlu0 %1177
    %v1179 = vlog2.pop %v1178
    %v1180 = vmul.f32 %v1179, 0.6931472
    %v1181 = vsub.f32 %v1174, %v1180
    %s1182 = scalar_lea.vmem [#allocation4], 56
    %1183 = vst [vmem:[%s1182] sm:$0xff] %v1181
    %1184 = vst [vmem:[#allocation2] sm:$0xff] %v1170
    %1185 = vst [vmem:[#allocation6] sm:$0xff] %v1170
    // Predicated region
    $region26: #{rnn_forward_seq.1} parent=1 // pred_check
      _
    $region27: #{rnn_forward_seq.1} parent=1 // pred_check_branch
      %1187 = sbr.rel (0) target = $region29
    $region28: #{rnn_forward_seq.1} parent=1 // pred_region
      %s1189 = ssub.s32 1024, 1024
      %1190 = vsyncadd [#allocation5], %s1189
      %s1191 = sshll.u32 [#allocation4], 4
      %s1192 = int_to_ptr.vmem [resolvable:$true] %s1191
      %1197 = dma.vmem_to_hbm [thread:$0]  %s1192, 1024, %s5, [#allocation5], 128, 128, 8
    $region29: #{rnn_forward_seq.1} parent=1 // pred_fallthru
      _
    // Predicated region
    $region30: #{rnn_forward_seq.1} parent=1 // pred_check
      _
    $region31: #{rnn_forward_seq.1} parent=1 // pred_check_branch
      %1199 = sbr.rel (0) target = $region33
    $region32: #{rnn_forward_seq.1} parent=1 // pred_region
      %s1201 = ssub.s32 128, 128
      %1202 = vsyncadd [#allocation7], %s1201
      %s1204 = sshll.u32 [#allocation6], 4
      %s1205 = int_to_ptr.vmem [resolvable:$true] %s1204
      %1207 = dma.vmem_to_hbm [thread:$0]  %s1205, 128, %s6, [#allocation7]
    $region33: #{rnn_forward_seq.1} parent=1 // pred_fallthru
      _
    // Predicated region
    $region34: #{rnn_forward_seq.1} parent=1 // pred_check
      _
    $region35: #{rnn_forward_seq.1} parent=1 // pred_check_branch
      %1209 = sbr.rel (0) target = $region37
    $region36: #{rnn_forward_seq.1} parent=1 // pred_region
      %1210 = dma.done [#allocation5], 1024
    $region37: #{rnn_forward_seq.1} parent=1 // pred_fallthru
      _
    // Predicated region
    $region38: #{rnn_forward_seq.1} parent=1 // pred_check
      _
    $region39: #{rnn_forward_seq.1} parent=1 // pred_check_branch
      %1212 = sbr.rel (0) target = $region41
    $region40: #{rnn_forward_seq.1} parent=1 // pred_region
      %1213 = dma.done [#allocation7], 128
    $region41: #{rnn_forward_seq.1} parent=1 // pred_fallthru
      _
    %1214 = vsyncpa [#allocation5], 1
    %1215 = vsyncpa [#allocation7], 1

</llo_original>
